<compile_context>
chip_gen: v7x
topology: tpu7x:2x2x1
jax: 0.10.0
libtpu: 0.0.40
codegen_flags: <defaults>
</compile_context>

<pallas_src>
import functools

import jax
import jax.numpy as jnp
from jax import lax
from jax.experimental import pallas as pl
from jax.experimental.pallas import tpu as pltpu

_C_IN, _H_IN, _W_IN = 6, 20, 20   # input channels / spatial (20 -> 256 flat feats)


# ----------------------------------------------------------------------------
# Fused forward kernel: conv1 -> conv2 -> conv3 -> flatten -> l1 -> l2
# ----------------------------------------------------------------------------
def _qnet_kernel(x_ref, w1_ref, b1_ref, w2_ref, b2_ref, w3_ref, b3_ref,
                 wl1_ref, bl1_ref, wl2_ref, bl2_ref,
                 o_ref, a2_ref, *, batch):
    f32 = jnp.float32
    B = batch

    # ---- conv1: single K=384 matmul over all batches' 6x6 output pixels ----
    # x_ref row b*36 + oh*6 + ow holds the 4-tap (384-lane) im2col features.
    acc1 = jnp.dot(x_ref[...], w1_ref[...], preferred_element_type=f32)
    acc1 = jnp.maximum(acc1 + b1_ref[...], 0.0)          # (B*36, 32)

    # ---- repack conv1 output into conv2's padded space-to-depth map --------
    # a2 row b*25 + h2*5 + w2 holds the 2x2 block of padded conv1 pixels for
    # s2d cell (h2, w2): lanes (r*2+q)*32 .. +32 = conv1 pixel (2h2-2+r, 2w2-2+q).
    # Border cells (h2 or w2 in {0,4}) are pure conv2 padding -> zeros.
    a2_ref[...] = jnp.zeros_like(a2_ref)
    for b in range(B):
        for h2 in (1, 2, 3):
            rows = []
            for w2c in (1, 2, 3):
                parts = []
                for r in range(2):
                    for q in range(2):
                        src = b * 36 + (2 * h2 - 2 + r) * 6 + (2 * w2c - 2 + q)
                        parts.append(acc1[src:src + 1, :])
                rows.append(jnp.concatenate(parts, axis=1))      # (1, 128)
            dst = b * 25 + h2 * 5 + 1
            a2_ref[dst:dst + 3, :] = jnp.concatenate(rows, axis=0)  # full-lane store

    # ---- conv2: 4x4 s2 p2 == 2x2 stride-1 over the s2d map, batch in M -----
    # acc2 local row b*25 + oh*5 + ow = conv2 output pixel (oh, ow) of batch b
    # (oh, ow in 0..3); other rows are junk and never read back.
    m2 = (B - 1) * 25 + 19
    acc2 = jnp.dot(a2_ref[0:m2, :], w2_ref[0], preferred_element_type=f32) + b2_ref[...]
    for t, (di, dj) in enumerate(((0, 1), (1, 0), (1, 1)), start=1):
        s = di * 5 + dj
        acc2 = acc2 + jnp.dot(a2_ref[s:s + m2, :], w2_ref[t],
                              preferred_element_type=f32)
    acc2 = jnp.maximum(acc2, 0.0)                         # ((B-1)*25+19, 64)

    # ---- conv3: 3x3 stride-1, taps sliced straight out of the acc2 value ---
    # acc3 local row b*25 + h*5 + w = conv3 output pixel (h, w) in {0,1}^2.
    m3 = (B - 1) * 25 + 7
    acc3 = jnp.dot(acc2[0:m3, :], w3_ref[0], preferred_element_type=f32) + b3_ref[...]
    t = 1
    for di in range(3):
        for dj in range(3):
            if di == 0 and dj == 0:
                continue
            s = di * 5 + dj
            acc3 = acc3 + jnp.dot(acc2[s:s + m3, :], w3_ref[t],
                                  preferred_element_type=f32)
            t += 1
    acc3 = jnp.maximum(acc3, 0.0)                         # ((B-1)*25+7, 64)

    # ---- flatten (lane concat) + Linear(256,128) + ReLU + Linear(128,n) ----
    # Valid acc3 rows per batch: {0,1,5,6} == flatten positions p = h*2+w.
    feat = jnp.concatenate(
        [jnp.concatenate([acc3[b * 25 + r:b * 25 + r + 1, :] for r in (0, 1, 5, 6)],
                         axis=1)
         for b in range(B)], axis=0)                      # (B, 256)
    h = jnp.maximum(jnp.dot(feat, wl1_ref[...], preferred_element_type=f32)
                    + bl1_ref[...], 0.0)
    o_ref[...] = (jnp.dot(h, wl2_ref[...], preferred_element_type=f32)
                  + bl2_ref[...])


# ----------------------------------------------------------------------------
# Input / weight preparation (glue; weights prepared once, outside forward)
# ----------------------------------------------------------------------------
def _im2col_conv1(x):
    """(B, 6, 20, 20) NCHW -> (B*36, 384): pad-4 NHWC, space-to-depth by 4
    (depth order (dh, dw, c)), then the 4 conv1 meta-taps concatenated along
    lanes for each of the 6x6 output pixels (no junk rows)."""
    B, C, H, W = x.shape
    assert (C, H, W) == (_C_IN, _H_IN, _W_IN), (C, H, W)
    x = jnp.transpose(x, (0, 2, 3, 1)).astype(jnp.float32)           # NHWC
    x = jnp.pad(x, ((0, 0), (4, 4), (4, 4), (0, 0)))                 # (B, 28, 28, 6)
    x = x.reshape(B, 7, 4, 7, 4, C)
    x = jnp.transpose(x, (0, 1, 3, 2, 4, 5)).reshape(B, 7, 7, 16 * C)  # (B,7,7,96)
    taps = [x[:, di:di + 6, dj:dj + 6, :] for di in range(2) for dj in range(2)]
    return jnp.concatenate(taps, axis=-1).reshape(B * 36, 4 * 16 * C)  # (B*36, 384)


def prepare_params(p):
    """One-time transform of raw PyTorch-layout params into the kernel layout
    (pre-transposed matmul weights, conv1 scale folded in, l1 taps fused)."""
    f32 = jnp.float32

    # conv1: fold 1/255; 4 meta-taps of the factor-4 s2d conv, fused along K.
    w1 = p["c1_w"].astype(f32) / 255.0                                # (32, 6, 8, 8)
    taps1 = [jnp.transpose(w1[:, :, 4 * di:4 * di + 4, 4 * dj:4 * dj + 4],
                           (2, 3, 1, 0)).reshape(96, 32)
             for di in range(2) for dj in range(2)]
    w1_full = jnp.concatenate(taps1, axis=0)                          # (384, 32)

    # conv2: 4 meta-taps of the factor-2 s2d conv.
    w2 = p["c2_w"].astype(f32)                                        # (64, 32, 4, 4)
    taps2 = [jnp.transpose(w2[:, :, 2 * di:2 * di + 2, 2 * dj:2 * dj + 2],
                           (2, 3, 1, 0)).reshape(128, 64)
             for di in range(2) for dj in range(2)]
    w2s = jnp.stack(taps2)                                            # (4, 128, 64)

    # conv3: one (C_in, C_out) matrix per tap.
    w3 = p["c3_w"].astype(f32)                                        # (64, 64, 3, 3)
    taps3 = [w3[:, :, di, dj].T for di in range(3) for dj in range(3)]
    w3s = jnp.stack(taps3)                                            # (9, 64, 64)

    # l1: flatten index is c*4 + p; kernel feature order is p*64 + c -> fuse
    # the 4 per-position taps into a single (256, 128) matrix.
    wl1 = p["l1_w"].astype(f32).reshape(128, 64, 4)                   # [j, c, p]
    wl1 = jnp.transpose(wl1, (2, 1, 0)).reshape(256, 128)             # [p*64+c, j]
    wl2 = p["l2_w"].astype(f32).T                                     # (128, n)

    return {
        "w1": w1_full, "b1": p["c1_b"].reshape(1, -1).astype(f32),
        "w2": w2s, "b2": p["c2_b"].reshape(1, -1).astype(f32),
        "w3": w3s, "b3": p["c3_b"].reshape(1, -1).astype(f32),
        "wl1": wl1, "bl1": p["l1_b"].reshape(1, -1).astype(f32),
        "wl2": wl2, "bl2": p["l2_b"].reshape(1, -1).astype(f32),
    }


# ----------------------------------------------------------------------------
# Fused forward (single pallas_call), jitted
# ----------------------------------------------------------------------------
@jax.jit
def qnetwork_forward(prepared, x):
    B = x.shape[0]
    n = prepared["wl2"].shape[1]
    xs = _im2col_conv1(x)

    def full(shape):
        nd = len(shape)
        return pl.BlockSpec(shape, lambda i, _nd=nd: (0,) * _nd)

    args = (xs, prepared["w1"], prepared["b1"], prepared["w2"], prepared["b2"],
            prepared["w3"], prepared["b3"], prepared["wl1"], prepared["bl1"],
            prepared["wl2"], prepared["bl2"])

    return pl.pallas_call(
        functools.partial(_qnet_kernel, batch=B),
        out_shape=jax.ShapeDtypeStruct((B, n), jnp.float32),
        grid=(1,),
        in_specs=[full(a.shape) for a in args],
        out_specs=full((B, n)),
        scratch_shapes=[
            pltpu.VMEM((B * 25, 128), jnp.float32),   # conv2 padded s2d input map
        ],
        compiler_params=pltpu.CompilerParams(
            dimension_semantics=("arbitrary",)),
    )(*args)


# ----------------------------------------------------------------------------
# Parameter initialization (deterministic, PyTorch-like uniform(+-1/sqrt(fan)))
# ----------------------------------------------------------------------------
def _uniform(key, shape, fan_in):
    bound = 1.0 / jnp.sqrt(jnp.float32(fan_in))
    return jax.random.uniform(key, shape, jnp.float32, -bound, bound)


def init_params(key, n_actions):
    ks = jax.random.split(key, 10)
    p = {}
    p["c1_w"] = _uniform(ks[0], (32, 6, 8, 8), 6 * 8 * 8)
    p["c1_b"] = _uniform(ks[1], (32,), 6 * 8 * 8)
    p["c2_w"] = _uniform(ks[2], (64, 32, 4, 4), 32 * 4 * 4)
    p["c2_b"] = _uniform(ks[3], (64,), 32 * 4 * 4)
    p["c3_w"] = _uniform(ks[4], (64, 64, 3, 3), 64 * 3 * 3)
    p["c3_b"] = _uniform(ks[5], (64,), 64 * 3 * 3)
    p["l1_w"] = _uniform(ks[6], (128, 256), 256)      # PyTorch Linear: (out, in)
    p["l1_b"] = _uniform(ks[7], (128,), 256)
    p["l2_w"] = _uniform(ks[8], (n_actions, 128), 128)
    p["l2_b"] = _uniform(ks[9], (n_actions,), 128)
    return p


# ----------------------------------------------------------------------------
# Pure-JAX reference (correctness check), uses raw PyTorch-layout params
# ----------------------------------------------------------------------------
def qnetwork_forward_ref(params, x):
    dn = ("NCHW", "OIHW", "NCHW")
    h = x / 255.0
    h = lax.conv_general_dilated(h, params["c1_w"], (4, 4), [(4, 4), (4, 4)],
                                 dimension_numbers=dn)
    h = jnp.maximum(h + params["c1_b"][None, :, None, None], 0.0)
    h = lax.conv_general_dilated(h, params["c2_w"], (2, 2), [(2, 2), (2, 2)],
                                 dimension_numbers=dn)
    h = jnp.maximum(h + params["c2_b"][None, :, None, None], 0.0)
    h = lax.conv_general_dilated(h, params["c3_w"], (1, 1), [(0, 0), (0, 0)],
                                 dimension_numbers=dn)
    h = jnp.maximum(h + params["c3_b"][None, :, None, None], 0.0)
    h = h.reshape(h.shape[0], -1)
    h = jnp.maximum(h @ params["l1_w"].T + params["l1_b"], 0.0)
    return h @ params["l2_w"].T + params["l2_b"]


if __name__ == "__main__":
    key = jax.random.PRNGKey(0)
    k_param, k_x = jax.random.split(key)

    n_actions = 4
    batch = 2
    # 20x20 input -> conv stack -> 64*2*2 = 256 features (matches Linear(256, 128)).
    x = jax.random.uniform(k_x, (batch, 6, 20, 20), jnp.float32, 0.0, 255.0)

    raw_params = init_params(k_param, n_actions)
    prepared = prepare_params(raw_params)      # one-time weight prep

    q = jax.block_until_ready(qnetwork_forward(prepared, x))
    assert q.shape == (batch, n_actions), q.shape

    q_ref = jax.block_until_ready(qnetwork_forward_ref(raw_params, x))
    assert jnp.allclose(q, q_ref, atol=1e-3, rtol=1e-3), (
        "Pallas output mismatch vs JAX reference")

    print("KERNEL_OK")
</pallas_src>

<mosaic_0001>
module attributes {stable_mosaic.version = 11 : i64} {
  func.func @_qnet_kernel(%arg0: i32, %arg1: memref<72x384xf32, #tpu.memory_space<vmem>>, %arg2: memref<384x32xf32, #tpu.memory_space<vmem>>, %arg3: memref<1x32xf32, #tpu.memory_space<vmem>>, %arg4: memref<4x128x64xf32, #tpu.memory_space<vmem>>, %arg5: memref<1x64xf32, #tpu.memory_space<vmem>>, %arg6: memref<9x64x64xf32, #tpu.memory_space<vmem>>, %arg7: memref<1x64xf32, #tpu.memory_space<vmem>>, %arg8: memref<256x128xf32, #tpu.memory_space<vmem>>, %arg9: memref<1x128xf32, #tpu.memory_space<vmem>>, %arg10: memref<128x4xf32, #tpu.memory_space<vmem>>, %arg11: memref<1x4xf32, #tpu.memory_space<vmem>>, %arg12: memref<2x4xf32, #tpu.memory_space<vmem>>, %arg13: memref<50x128xf32, #tpu.memory_space<vmem>>) attributes {dimension_semantics = [#tpu.dimension_semantics<arbitrary>], iteration_bounds = array<i64: 1>, scalar_prefetch = 0 : i64, scratch_operands = 1 : i64, tpu.core_type = #tpu.core_type<tc>, window_params = [{pipeline_mode = #tpu.pipeline_mode<synchronous>, transform_indices = @transform_0, window_bounds = array<i64: 72, 384>}, {pipeline_mode = #tpu.pipeline_mode<synchronous>, transform_indices = @transform_1, window_bounds = array<i64: 384, 32>}, {pipeline_mode = #tpu.pipeline_mode<synchronous>, transform_indices = @transform_2, window_bounds = array<i64: 1, 32>}, {pipeline_mode = #tpu.pipeline_mode<synchronous>, transform_indices = @transform_3, window_bounds = array<i64: 4, 128, 64>}, {pipeline_mode = #tpu.pipeline_mode<synchronous>, transform_indices = @transform_4, window_bounds = array<i64: 1, 64>}, {pipeline_mode = #tpu.pipeline_mode<synchronous>, transform_indices = @transform_5, window_bounds = array<i64: 9, 64, 64>}, {pipeline_mode = #tpu.pipeline_mode<synchronous>, transform_indices = @transform_6, window_bounds = array<i64: 1, 64>}, {pipeline_mode = #tpu.pipeline_mode<synchronous>, transform_indices = @transform_7, window_bounds = array<i64: 256, 128>}, {pipeline_mode = #tpu.pipeline_mode<synchronous>, transform_indices = @transform_8, window_bounds = array<i64: 1, 128>}, {pipeline_mode = #tpu.pipeline_mode<synchronous>, transform_indices = @transform_9, window_bounds = array<i64: 128, 4>}, {pipeline_mode = #tpu.pipeline_mode<synchronous>, transform_indices = @transform_10, window_bounds = array<i64: 1, 4>}, {pipeline_mode = #tpu.pipeline_mode<synchronous>, transform_indices = @transform_11, window_bounds = array<i64: 2, 4>}]} {
    %c0 = arith.constant 0 : index
    %c0_0 = arith.constant 0 : index
    %0 = vector.load %arg1[%c0, %c0_0] : memref<72x384xf32, #tpu.memory_space<vmem>>, vector<72x384xf32>
    %c0_1 = arith.constant 0 : index
    %c0_2 = arith.constant 0 : index
    %1 = vector.load %arg2[%c0_1, %c0_2] : memref<384x32xf32, #tpu.memory_space<vmem>>, vector<384x32xf32>
    %cst = arith.constant dense<0.000000e+00> : vector<72x32xf32>
    %2 = tpu.matmul %0, %1, %cst {dimension_numbers = #tpu.dot_dimension_numbers<[1], [0], [0], [1], [0, 0, 1, 1], [], []>} : vector<72x384xf32>, vector<384x32xf32>, vector<72x32xf32> -> vector<72x32xf32>
    %c0_3 = arith.constant 0 : index
    %c0_4 = arith.constant 0 : index
    %3 = vector.load %arg3[%c0_3, %c0_4] : memref<1x32xf32, #tpu.memory_space<vmem>>, vector<1x32xf32>
    %4 = vector.broadcast %3 : vector<1x32xf32> to vector<72x32xf32>
    %5 = arith.addf %2, %4 : vector<72x32xf32>
    %cst_5 = arith.constant 0.000000e+00 : f32
    %6 = vector.broadcast %cst_5 : f32 to vector<72x32xf32>
    %7 = arith.maximumf %5, %6 : vector<72x32xf32>
    %cst_6 = arith.constant 0.000000e+00 : f32
    %8 = vector.broadcast %cst_6 : f32 to vector<50x128xf32>
    %c0_7 = arith.constant 0 : index
    %c0_8 = arith.constant 0 : index
    %9 = vector.load %arg13[%c0_7, %c0_8] : memref<50x128xf32, #tpu.memory_space<vmem>>, vector<50x128xf32>
    tpu.vector_store %arg13[%c0_7, %c0_8], %8 {strides = array<i32>} : memref<50x128xf32, #tpu.memory_space<vmem>>, vector<50x128xf32>,
    %10 = vector.extract_strided_slice %7 {offsets = [0, 0], sizes = [1, 32], strides = [1, 1]} : vector<72x32xf32> to vector<1x32xf32>
    %11 = vector.extract_strided_slice %7 {offsets = [1, 0], sizes = [1, 32], strides = [1, 1]} : vector<72x32xf32> to vector<1x32xf32>
    %12 = vector.extract_strided_slice %7 {offsets = [6, 0], sizes = [1, 32], strides = [1, 1]} : vector<72x32xf32> to vector<1x32xf32>
    %13 = vector.extract_strided_slice %7 {offsets = [7, 0], sizes = [1, 32], strides = [1, 1]} : vector<72x32xf32> to vector<1x32xf32>
    %14 = tpu.concatenate %10, %11, %12, %13 in 1 : vector<1x32xf32>, vector<1x32xf32>, vector<1x32xf32>, vector<1x32xf32> -> vector<1x128xf32>
    %15 = vector.extract_strided_slice %7 {offsets = [2, 0], sizes = [1, 32], strides = [1, 1]} : vector<72x32xf32> to vector<1x32xf32>
    %16 = vector.extract_strided_slice %7 {offsets = [3, 0], sizes = [1, 32], strides = [1, 1]} : vector<72x32xf32> to vector<1x32xf32>
    %17 = vector.extract_strided_slice %7 {offsets = [8, 0], sizes = [1, 32], strides = [1, 1]} : vector<72x32xf32> to vector<1x32xf32>
    %18 = vector.extract_strided_slice %7 {offsets = [9, 0], sizes = [1, 32], strides = [1, 1]} : vector<72x32xf32> to vector<1x32xf32>
    %19 = tpu.concatenate %15, %16, %17, %18 in 1 : vector<1x32xf32>, vector<1x32xf32>, vector<1x32xf32>, vector<1x32xf32> -> vector<1x128xf32>
    %20 = vector.extract_strided_slice %7 {offsets = [4, 0], sizes = [1, 32], strides = [1, 1]} : vector<72x32xf32> to vector<1x32xf32>
    %21 = vector.extract_strided_slice %7 {offsets = [5, 0], sizes = [1, 32], strides = [1, 1]} : vector<72x32xf32> to vector<1x32xf32>
    %22 = vector.extract_strided_slice %7 {offsets = [10, 0], sizes = [1, 32], strides = [1, 1]} : vector<72x32xf32> to vector<1x32xf32>
    %23 = vector.extract_strided_slice %7 {offsets = [11, 0], sizes = [1, 32], strides = [1, 1]} : vector<72x32xf32> to vector<1x32xf32>
    %24 = tpu.concatenate %20, %21, %22, %23 in 1 : vector<1x32xf32>, vector<1x32xf32>, vector<1x32xf32>, vector<1x32xf32> -> vector<1x128xf32>
    %25 = tpu.concatenate %14, %19, %24 in 0 : vector<1x128xf32>, vector<1x128xf32>, vector<1x128xf32> -> vector<3x128xf32>
    %c6 = arith.constant 6 : index
    %c0_9 = arith.constant 0 : index
    %26 = vector.load %arg13[%c6, %c0_9] : memref<50x128xf32, #tpu.memory_space<vmem>>, vector<3x128xf32>
    tpu.vector_store %arg13[%c6, %c0_9], %25 {strides = array<i32>} : memref<50x128xf32, #tpu.memory_space<vmem>>, vector<3x128xf32>,
    %27 = vector.extract_strided_slice %7 {offsets = [12, 0], sizes = [1, 32], strides = [1, 1]} : vector<72x32xf32> to vector<1x32xf32>
    %28 = vector.extract_strided_slice %7 {offsets = [13, 0], sizes = [1, 32], strides = [1, 1]} : vector<72x32xf32> to vector<1x32xf32>
    %29 = vector.extract_strided_slice %7 {offsets = [18, 0], sizes = [1, 32], strides = [1, 1]} : vector<72x32xf32> to vector<1x32xf32>
    %30 = vector.extract_strided_slice %7 {offsets = [19, 0], sizes = [1, 32], strides = [1, 1]} : vector<72x32xf32> to vector<1x32xf32>
    %31 = tpu.concatenate %27, %28, %29, %30 in 1 : vector<1x32xf32>, vector<1x32xf32>, vector<1x32xf32>, vector<1x32xf32> -> vector<1x128xf32>
    %32 = vector.extract_strided_slice %7 {offsets = [14, 0], sizes = [1, 32], strides = [1, 1]} : vector<72x32xf32> to vector<1x32xf32>
    %33 = vector.extract_strided_slice %7 {offsets = [15, 0], sizes = [1, 32], strides = [1, 1]} : vector<72x32xf32> to vector<1x32xf32>
    %34 = vector.extract_strided_slice %7 {offsets = [20, 0], sizes = [1, 32], strides = [1, 1]} : vector<72x32xf32> to vector<1x32xf32>
    %35 = vector.extract_strided_slice %7 {offsets = [21, 0], sizes = [1, 32], strides = [1, 1]} : vector<72x32xf32> to vector<1x32xf32>
    %36 = tpu.concatenate %32, %33, %34, %35 in 1 : vector<1x32xf32>, vector<1x32xf32>, vector<1x32xf32>, vector<1x32xf32> -> vector<1x128xf32>
    %37 = vector.extract_strided_slice %7 {offsets = [16, 0], sizes = [1, 32], strides = [1, 1]} : vector<72x32xf32> to vector<1x32xf32>
    %38 = vector.extract_strided_slice %7 {offsets = [17, 0], sizes = [1, 32], strides = [1, 1]} : vector<72x32xf32> to vector<1x32xf32>
    %39 = vector.extract_strided_slice %7 {offsets = [22, 0], sizes = [1, 32], strides = [1, 1]} : vector<72x32xf32> to vector<1x32xf32>
    %40 = vector.extract_strided_slice %7 {offsets = [23, 0], sizes = [1, 32], strides = [1, 1]} : vector<72x32xf32> to vector<1x32xf32>
    %41 = tpu.concatenate %37, %38, %39, %40 in 1 : vector<1x32xf32>, vector<1x32xf32>, vector<1x32xf32>, vector<1x32xf32> -> vector<1x128xf32>
    %42 = tpu.concatenate %31, %36, %41 in 0 : vector<1x128xf32>, vector<1x128xf32>, vector<1x128xf32> -> vector<3x128xf32>
    %c11 = arith.constant 11 : index
    %c0_10 = arith.constant 0 : index
    %43 = vector.load %arg13[%c11, %c0_10] : memref<50x128xf32, #tpu.memory_space<vmem>>, vector<3x128xf32>
    tpu.vector_store %arg13[%c11, %c0_10], %42 {strides = array<i32>} : memref<50x128xf32, #tpu.memory_space<vmem>>, vector<3x128xf32>,
    %44 = vector.extract_strided_slice %7 {offsets = [24, 0], sizes = [1, 32], strides = [1, 1]} : vector<72x32xf32> to vector<1x32xf32>
    %45 = vector.extract_strided_slice %7 {offsets = [25, 0], sizes = [1, 32], strides = [1, 1]} : vector<72x32xf32> to vector<1x32xf32>
    %46 = vector.extract_strided_slice %7 {offsets = [30, 0], sizes = [1, 32], strides = [1, 1]} : vector<72x32xf32> to vector<1x32xf32>
    %47 = vector.extract_strided_slice %7 {offsets = [31, 0], sizes = [1, 32], strides = [1, 1]} : vector<72x32xf32> to vector<1x32xf32>
    %48 = tpu.concatenate %44, %45, %46, %47 in 1 : vector<1x32xf32>, vector<1x32xf32>, vector<1x32xf32>, vector<1x32xf32> -> vector<1x128xf32>
    %49 = vector.extract_strided_slice %7 {offsets = [26, 0], sizes = [1, 32], strides = [1, 1]} : vector<72x32xf32> to vector<1x32xf32>
    %50 = vector.extract_strided_slice %7 {offsets = [27, 0], sizes = [1, 32], strides = [1, 1]} : vector<72x32xf32> to vector<1x32xf32>
    %51 = vector.extract_strided_slice %7 {offsets = [32, 0], sizes = [1, 32], strides = [1, 1]} : vector<72x32xf32> to vector<1x32xf32>
    %52 = vector.extract_strided_slice %7 {offsets = [33, 0], sizes = [1, 32], strides = [1, 1]} : vector<72x32xf32> to vector<1x32xf32>
    %53 = tpu.concatenate %49, %50, %51, %52 in 1 : vector<1x32xf32>, vector<1x32xf32>, vector<1x32xf32>, vector<1x32xf32> -> vector<1x128xf32>
    %54 = vector.extract_strided_slice %7 {offsets = [28, 0], sizes = [1, 32], strides = [1, 1]} : vector<72x32xf32> to vector<1x32xf32>
    %55 = vector.extract_strided_slice %7 {offsets = [29, 0], sizes = [1, 32], strides = [1, 1]} : vector<72x32xf32> to vector<1x32xf32>
    %56 = vector.extract_strided_slice %7 {offsets = [34, 0], sizes = [1, 32], strides = [1, 1]} : vector<72x32xf32> to vector<1x32xf32>
    %57 = vector.extract_strided_slice %7 {offsets = [35, 0], sizes = [1, 32], strides = [1, 1]} : vector<72x32xf32> to vector<1x32xf32>
    %58 = tpu.concatenate %54, %55, %56, %57 in 1 : vector<1x32xf32>, vector<1x32xf32>, vector<1x32xf32>, vector<1x32xf32> -> vector<1x128xf32>
    %59 = tpu.concatenate %48, %53, %58 in 0 : vector<1x128xf32>, vector<1x128xf32>, vector<1x128xf32> -> vector<3x128xf32>
    %c16 = arith.constant 16 : index
    %c0_11 = arith.constant 0 : index
    %60 = vector.load %arg13[%c16, %c0_11] : memref<50x128xf32, #tpu.memory_space<vmem>>, vector<3x128xf32>
    tpu.vector_store %arg13[%c16, %c0_11], %59 {strides = array<i32>} : memref<50x128xf32, #tpu.memory_space<vmem>>, vector<3x128xf32>,
    %61 = vector.extract_strided_slice %7 {offsets = [36, 0], sizes = [1, 32], strides = [1, 1]} : vector<72x32xf32> to vector<1x32xf32>
    %62 = vector.extract_strided_slice %7 {offsets = [37, 0], sizes = [1, 32], strides = [1, 1]} : vector<72x32xf32> to vector<1x32xf32>
    %63 = vector.extract_strided_slice %7 {offsets = [42, 0], sizes = [1, 32], strides = [1, 1]} : vector<72x32xf32> to vector<1x32xf32>
    %64 = vector.extract_strided_slice %7 {offsets = [43, 0], sizes = [1, 32], strides = [1, 1]} : vector<72x32xf32> to vector<1x32xf32>
    %65 = tpu.concatenate %61, %62, %63, %64 in 1 : vector<1x32xf32>, vector<1x32xf32>, vector<1x32xf32>, vector<1x32xf32> -> vector<1x128xf32>
    %66 = vector.extract_strided_slice %7 {offsets = [38, 0], sizes = [1, 32], strides = [1, 1]} : vector<72x32xf32> to vector<1x32xf32>
    %67 = vector.extract_strided_slice %7 {offsets = [39, 0], sizes = [1, 32], strides = [1, 1]} : vector<72x32xf32> to vector<1x32xf32>
    %68 = vector.extract_strided_slice %7 {offsets = [44, 0], sizes = [1, 32], strides = [1, 1]} : vector<72x32xf32> to vector<1x32xf32>
    %69 = vector.extract_strided_slice %7 {offsets = [45, 0], sizes = [1, 32], strides = [1, 1]} : vector<72x32xf32> to vector<1x32xf32>
    %70 = tpu.concatenate %66, %67, %68, %69 in 1 : vector<1x32xf32>, vector<1x32xf32>, vector<1x32xf32>, vector<1x32xf32> -> vector<1x128xf32>
    %71 = vector.extract_strided_slice %7 {offsets = [40, 0], sizes = [1, 32], strides = [1, 1]} : vector<72x32xf32> to vector<1x32xf32>
    %72 = vector.extract_strided_slice %7 {offsets = [41, 0], sizes = [1, 32], strides = [1, 1]} : vector<72x32xf32> to vector<1x32xf32>
    %73 = vector.extract_strided_slice %7 {offsets = [46, 0], sizes = [1, 32], strides = [1, 1]} : vector<72x32xf32> to vector<1x32xf32>
    %74 = vector.extract_strided_slice %7 {offsets = [47, 0], sizes = [1, 32], strides = [1, 1]} : vector<72x32xf32> to vector<1x32xf32>
    %75 = tpu.concatenate %71, %72, %73, %74 in 1 : vector<1x32xf32>, vector<1x32xf32>, vector<1x32xf32>, vector<1x32xf32> -> vector<1x128xf32>
    %76 = tpu.concatenate %65, %70, %75 in 0 : vector<1x128xf32>, vector<1x128xf32>, vector<1x128xf32> -> vector<3x128xf32>
    %c31 = arith.constant 31 : index
    %c0_12 = arith.constant 0 : index
    %77 = vector.load %arg13[%c31, %c0_12] : memref<50x128xf32, #tpu.memory_space<vmem>>, vector<3x128xf32>
    tpu.vector_store %arg13[%c31, %c0_12], %76 {strides = array<i32>} : memref<50x128xf32, #tpu.memory_space<vmem>>, vector<3x128xf32>,
    %78 = vector.extract_strided_slice %7 {offsets = [48, 0], sizes = [1, 32], strides = [1, 1]} : vector<72x32xf32> to vector<1x32xf32>
    %79 = vector.extract_strided_slice %7 {offsets = [49, 0], sizes = [1, 32], strides = [1, 1]} : vector<72x32xf32> to vector<1x32xf32>
    %80 = vector.extract_strided_slice %7 {offsets = [54, 0], sizes = [1, 32], strides = [1, 1]} : vector<72x32xf32> to vector<1x32xf32>
    %81 = vector.extract_strided_slice %7 {offsets = [55, 0], sizes = [1, 32], strides = [1, 1]} : vector<72x32xf32> to vector<1x32xf32>
    %82 = tpu.concatenate %78, %79, %80, %81 in 1 : vector<1x32xf32>, vector<1x32xf32>, vector<1x32xf32>, vector<1x32xf32> -> vector<1x128xf32>
    %83 = vector.extract_strided_slice %7 {offsets = [50, 0], sizes = [1, 32], strides = [1, 1]} : vector<72x32xf32> to vector<1x32xf32>
    %84 = vector.extract_strided_slice %7 {offsets = [51, 0], sizes = [1, 32], strides = [1, 1]} : vector<72x32xf32> to vector<1x32xf32>
    %85 = vector.extract_strided_slice %7 {offsets = [56, 0], sizes = [1, 32], strides = [1, 1]} : vector<72x32xf32> to vector<1x32xf32>
    %86 = vector.extract_strided_slice %7 {offsets = [57, 0], sizes = [1, 32], strides = [1, 1]} : vector<72x32xf32> to vector<1x32xf32>
    %87 = tpu.concatenate %83, %84, %85, %86 in 1 : vector<1x32xf32>, vector<1x32xf32>, vector<1x32xf32>, vector<1x32xf32> -> vector<1x128xf32>
    %88 = vector.extract_strided_slice %7 {offsets = [52, 0], sizes = [1, 32], strides = [1, 1]} : vector<72x32xf32> to vector<1x32xf32>
    %89 = vector.extract_strided_slice %7 {offsets = [53, 0], sizes = [1, 32], strides = [1, 1]} : vector<72x32xf32> to vector<1x32xf32>
    %90 = vector.extract_strided_slice %7 {offsets = [58, 0], sizes = [1, 32], strides = [1, 1]} : vector<72x32xf32> to vector<1x32xf32>
    %91 = vector.extract_strided_slice %7 {offsets = [59, 0], sizes = [1, 32], strides = [1, 1]} : vector<72x32xf32> to vector<1x32xf32>
    %92 = tpu.concatenate %88, %89, %90, %91 in 1 : vector<1x32xf32>, vector<1x32xf32>, vector<1x32xf32>, vector<1x32xf32> -> vector<1x128xf32>
    %93 = tpu.concatenate %82, %87, %92 in 0 : vector<1x128xf32>, vector<1x128xf32>, vector<1x128xf32> -> vector<3x128xf32>
    %c36 = arith.constant 36 : index
    %c0_13 = arith.constant 0 : index
    %94 = vector.load %arg13[%c36, %c0_13] : memref<50x128xf32, #tpu.memory_space<vmem>>, vector<3x128xf32>
    tpu.vector_store %arg13[%c36, %c0_13], %93 {strides = array<i32>} : memref<50x128xf32, #tpu.memory_space<vmem>>, vector<3x128xf32>,
    %95 = vector.extract_strided_slice %7 {offsets = [60, 0], sizes = [1, 32], strides = [1, 1]} : vector<72x32xf32> to vector<1x32xf32>
    %96 = vector.extract_strided_slice %7 {offsets = [61, 0], sizes = [1, 32], strides = [1, 1]} : vector<72x32xf32> to vector<1x32xf32>
    %97 = vector.extract_strided_slice %7 {offsets = [66, 0], sizes = [1, 32], strides = [1, 1]} : vector<72x32xf32> to vector<1x32xf32>
    %98 = vector.extract_strided_slice %7 {offsets = [67, 0], sizes = [1, 32], strides = [1, 1]} : vector<72x32xf32> to vector<1x32xf32>
    %99 = tpu.concatenate %95, %96, %97, %98 in 1 : vector<1x32xf32>, vector<1x32xf32>, vector<1x32xf32>, vector<1x32xf32> -> vector<1x128xf32>
    %100 = vector.extract_strided_slice %7 {offsets = [62, 0], sizes = [1, 32], strides = [1, 1]} : vector<72x32xf32> to vector<1x32xf32>
    %101 = vector.extract_strided_slice %7 {offsets = [63, 0], sizes = [1, 32], strides = [1, 1]} : vector<72x32xf32> to vector<1x32xf32>
    %102 = vector.extract_strided_slice %7 {offsets = [68, 0], sizes = [1, 32], strides = [1, 1]} : vector<72x32xf32> to vector<1x32xf32>
    %103 = vector.extract_strided_slice %7 {offsets = [69, 0], sizes = [1, 32], strides = [1, 1]} : vector<72x32xf32> to vector<1x32xf32>
    %104 = tpu.concatenate %100, %101, %102, %103 in 1 : vector<1x32xf32>, vector<1x32xf32>, vector<1x32xf32>, vector<1x32xf32> -> vector<1x128xf32>
    %105 = vector.extract_strided_slice %7 {offsets = [64, 0], sizes = [1, 32], strides = [1, 1]} : vector<72x32xf32> to vector<1x32xf32>
    %106 = vector.extract_strided_slice %7 {offsets = [65, 0], sizes = [1, 32], strides = [1, 1]} : vector<72x32xf32> to vector<1x32xf32>
    %107 = vector.extract_strided_slice %7 {offsets = [70, 0], sizes = [1, 32], strides = [1, 1]} : vector<72x32xf32> to vector<1x32xf32>
    %108 = vector.extract_strided_slice %7 {offsets = [71, 0], sizes = [1, 32], strides = [1, 1]} : vector<72x32xf32> to vector<1x32xf32>
    %109 = tpu.concatenate %105, %106, %107, %108 in 1 : vector<1x32xf32>, vector<1x32xf32>, vector<1x32xf32>, vector<1x32xf32> -> vector<1x128xf32>
    %110 = tpu.concatenate %99, %104, %109 in 0 : vector<1x128xf32>, vector<1x128xf32>, vector<1x128xf32> -> vector<3x128xf32>
    %c41 = arith.constant 41 : index
    %c0_14 = arith.constant 0 : index
    %111 = vector.load %arg13[%c41, %c0_14] : memref<50x128xf32, #tpu.memory_space<vmem>>, vector<3x128xf32>
    tpu.vector_store %arg13[%c41, %c0_14], %110 {strides = array<i32>} : memref<50x128xf32, #tpu.memory_space<vmem>>, vector<3x128xf32>,
    %c0_15 = arith.constant 0 : index
    %c0_16 = arith.constant 0 : index
    %112 = vector.load %arg13[%c0_15, %c0_16] : memref<50x128xf32, #tpu.memory_space<vmem>>, vector<44x128xf32>
    %c0_17 = arith.constant 0 : index
    %c0_18 = arith.constant 0 : index
    %c0_19 = arith.constant 0 : index
    %113 = vector.load %arg4[%c0_17, %c0_18, %c0_19] : memref<4x128x64xf32, #tpu.memory_space<vmem>>, vector<1x128x64xf32>
    %114 = vector.shape_cast %113 : vector<1x128x64xf32> to vector<128x64xf32>
    %cst_20 = arith.constant dense<0.000000e+00> : vector<44x64xf32>
    %115 = tpu.matmul %112, %114, %cst_20 {dimension_numbers = #tpu.dot_dimension_numbers<[1], [0], [0], [1], [0, 0, 1, 1], [], []>} : vector<44x128xf32>, vector<128x64xf32>, vector<44x64xf32> -> vector<44x64xf32>
    %c0_21 = arith.constant 0 : index
    %c0_22 = arith.constant 0 : index
    %116 = vector.load %arg5[%c0_21, %c0_22] : memref<1x64xf32, #tpu.memory_space<vmem>>, vector<1x64xf32>
    %117 = vector.broadcast %116 : vector<1x64xf32> to vector<44x64xf32>
    %118 = arith.addf %115, %117 : vector<44x64xf32>
    %c1 = arith.constant 1 : index
    %c0_23 = arith.constant 0 : index
    %119 = vector.load %arg13[%c1, %c0_23] : memref<50x128xf32, #tpu.memory_space<vmem>>, vector<44x128xf32>
    %c1_24 = arith.constant 1 : index
    %c0_25 = arith.constant 0 : index
    %c0_26 = arith.constant 0 : index
    %120 = vector.load %arg4[%c1_24, %c0_25, %c0_26] : memref<4x128x64xf32, #tpu.memory_space<vmem>>, vector<1x128x64xf32>
    %121 = vector.shape_cast %120 : vector<1x128x64xf32> to vector<128x64xf32>
    %cst_27 = arith.constant dense<0.000000e+00> : vector<44x64xf32>
    %122 = tpu.matmul %119, %121, %cst_27 {dimension_numbers = #tpu.dot_dimension_numbers<[1], [0], [0], [1], [0, 0, 1, 1], [], []>} : vector<44x128xf32>, vector<128x64xf32>, vector<44x64xf32> -> vector<44x64xf32>
    %123 = arith.addf %118, %122 : vector<44x64xf32>
    %c5 = arith.constant 5 : index
    %c0_28 = arith.constant 0 : index
    %124 = vector.load %arg13[%c5, %c0_28] : memref<50x128xf32, #tpu.memory_space<vmem>>, vector<44x128xf32>
    %c2 = arith.constant 2 : index
    %c0_29 = arith.constant 0 : index
    %c0_30 = arith.constant 0 : index
    %125 = vector.load %arg4[%c2, %c0_29, %c0_30] : memref<4x128x64xf32, #tpu.memory_space<vmem>>, vector<1x128x64xf32>
    %126 = vector.shape_cast %125 : vector<1x128x64xf32> to vector<128x64xf32>
    %cst_31 = arith.constant dense<0.000000e+00> : vector<44x64xf32>
    %127 = tpu.matmul %124, %126, %cst_31 {dimension_numbers = #tpu.dot_dimension_numbers<[1], [0], [0], [1], [0, 0, 1, 1], [], []>} : vector<44x128xf32>, vector<128x64xf32>, vector<44x64xf32> -> vector<44x64xf32>
    %128 = arith.addf %123, %127 : vector<44x64xf32>
    %c6_32 = arith.constant 6 : index
    %c0_33 = arith.constant 0 : index
    %129 = vector.load %arg13[%c6_32, %c0_33] : memref<50x128xf32, #tpu.memory_space<vmem>>, vector<44x128xf32>
    %c3 = arith.constant 3 : index
    %c0_34 = arith.constant 0 : index
    %c0_35 = arith.constant 0 : index
    %130 = vector.load %arg4[%c3, %c0_34, %c0_35] : memref<4x128x64xf32, #tpu.memory_space<vmem>>, vector<1x128x64xf32>
    %131 = vector.shape_cast %130 : vector<1x128x64xf32> to vector<128x64xf32>
    %cst_36 = arith.constant dense<0.000000e+00> : vector<44x64xf32>
    %132 = tpu.matmul %129, %131, %cst_36 {dimension_numbers = #tpu.dot_dimension_numbers<[1], [0], [0], [1], [0, 0, 1, 1], [], []>} : vector<44x128xf32>, vector<128x64xf32>, vector<44x64xf32> -> vector<44x64xf32>
    %133 = arith.addf %128, %132 : vector<44x64xf32>
    %cst_37 = arith.constant 0.000000e+00 : f32
    %134 = vector.broadcast %cst_37 : f32 to vector<44x64xf32>
    %135 = arith.maximumf %133, %134 : vector<44x64xf32>
    %136 = vector.extract_strided_slice %135 {offsets = [0, 0], sizes = [32, 64], strides = [1, 1]} : vector<44x64xf32> to vector<32x64xf32>
    %c0_38 = arith.constant 0 : index
    %c0_39 = arith.constant 0 : index
    %c0_40 = arith.constant 0 : index
    %137 = vector.load %arg6[%c0_38, %c0_39, %c0_40] : memref<9x64x64xf32, #tpu.memory_space<vmem>>, vector<1x64x64xf32>
    %138 = vector.shape_cast %137 : vector<1x64x64xf32> to vector<64x64xf32>
    %cst_41 = arith.constant dense<0.000000e+00> : vector<32x64xf32>
    %139 = tpu.matmul %136, %138, %cst_41 {dimension_numbers = #tpu.dot_dimension_numbers<[1], [0], [0], [1], [0, 0, 1, 1], [], []>} : vector<32x64xf32>, vector<64x64xf32>, vector<32x64xf32> -> vector<32x64xf32>
    %c0_42 = arith.constant 0 : index
    %c0_43 = arith.constant 0 : index
    %140 = vector.load %arg7[%c0_42, %c0_43] : memref<1x64xf32, #tpu.memory_space<vmem>>, vector<1x64xf32>
    %141 = vector.broadcast %140 : vector<1x64xf32> to vector<32x64xf32>
    %142 = arith.addf %139, %141 : vector<32x64xf32>
    %143 = vector.extract_strided_slice %135 {offsets = [1, 0], sizes = [32, 64], strides = [1, 1]} : vector<44x64xf32> to vector<32x64xf32>
    %c1_44 = arith.constant 1 : index
    %c0_45 = arith.constant 0 : index
    %c0_46 = arith.constant 0 : index
    %144 = vector.load %arg6[%c1_44, %c0_45, %c0_46] : memref<9x64x64xf32, #tpu.memory_space<vmem>>, vector<1x64x64xf32>
    %145 = vector.shape_cast %144 : vector<1x64x64xf32> to vector<64x64xf32>
    %cst_47 = arith.constant dense<0.000000e+00> : vector<32x64xf32>
    %146 = tpu.matmul %143, %145, %cst_47 {dimension_numbers = #tpu.dot_dimension_numbers<[1], [0], [0], [1], [0, 0, 1, 1], [], []>} : vector<32x64xf32>, vector<64x64xf32>, vector<32x64xf32> -> vector<32x64xf32>
    %147 = arith.addf %142, %146 : vector<32x64xf32>
    %148 = vector.extract_strided_slice %135 {offsets = [2, 0], sizes = [32, 64], strides = [1, 1]} : vector<44x64xf32> to vector<32x64xf32>
    %c2_48 = arith.constant 2 : index
    %c0_49 = arith.constant 0 : index
    %c0_50 = arith.constant 0 : index
    %149 = vector.load %arg6[%c2_48, %c0_49, %c0_50] : memref<9x64x64xf32, #tpu.memory_space<vmem>>, vector<1x64x64xf32>
    %150 = vector.shape_cast %149 : vector<1x64x64xf32> to vector<64x64xf32>
    %cst_51 = arith.constant dense<0.000000e+00> : vector<32x64xf32>
    %151 = tpu.matmul %148, %150, %cst_51 {dimension_numbers = #tpu.dot_dimension_numbers<[1], [0], [0], [1], [0, 0, 1, 1], [], []>} : vector<32x64xf32>, vector<64x64xf32>, vector<32x64xf32> -> vector<32x64xf32>
    %152 = arith.addf %147, %151 : vector<32x64xf32>
    %153 = vector.extract_strided_slice %135 {offsets = [5, 0], sizes = [32, 64], strides = [1, 1]} : vector<44x64xf32> to vector<32x64xf32>
    %c3_52 = arith.constant 3 : index
    %c0_53 = arith.constant 0 : index
    %c0_54 = arith.constant 0 : index
    %154 = vector.load %arg6[%c3_52, %c0_53, %c0_54] : memref<9x64x64xf32, #tpu.memory_space<vmem>>, vector<1x64x64xf32>
    %155 = vector.shape_cast %154 : vector<1x64x64xf32> to vector<64x64xf32>
    %cst_55 = arith.constant dense<0.000000e+00> : vector<32x64xf32>
    %156 = tpu.matmul %153, %155, %cst_55 {dimension_numbers = #tpu.dot_dimension_numbers<[1], [0], [0], [1], [0, 0, 1, 1], [], []>} : vector<32x64xf32>, vector<64x64xf32>, vector<32x64xf32> -> vector<32x64xf32>
    %157 = arith.addf %152, %156 : vector<32x64xf32>
    %158 = vector.extract_strided_slice %135 {offsets = [6, 0], sizes = [32, 64], strides = [1, 1]} : vector<44x64xf32> to vector<32x64xf32>
    %c4 = arith.constant 4 : index
    %c0_56 = arith.constant 0 : index
    %c0_57 = arith.constant 0 : index
    %159 = vector.load %arg6[%c4, %c0_56, %c0_57] : memref<9x64x64xf32, #tpu.memory_space<vmem>>, vector<1x64x64xf32>
    %160 = vector.shape_cast %159 : vector<1x64x64xf32> to vector<64x64xf32>
    %cst_58 = arith.constant dense<0.000000e+00> : vector<32x64xf32>
    %161 = tpu.matmul %158, %160, %cst_58 {dimension_numbers = #tpu.dot_dimension_numbers<[1], [0], [0], [1], [0, 0, 1, 1], [], []>} : vector<32x64xf32>, vector<64x64xf32>, vector<32x64xf32> -> vector<32x64xf32>
    %162 = arith.addf %157, %161 : vector<32x64xf32>
    %163 = vector.extract_strided_slice %135 {offsets = [7, 0], sizes = [32, 64], strides = [1, 1]} : vector<44x64xf32> to vector<32x64xf32>
    %c5_59 = arith.constant 5 : index
    %c0_60 = arith.constant 0 : index
    %c0_61 = arith.constant 0 : index
    %164 = vector.load %arg6[%c5_59, %c0_60, %c0_61] : memref<9x64x64xf32, #tpu.memory_space<vmem>>, vector<1x64x64xf32>
    %165 = vector.shape_cast %164 : vector<1x64x64xf32> to vector<64x64xf32>
    %cst_62 = arith.constant dense<0.000000e+00> : vector<32x64xf32>
    %166 = tpu.matmul %163, %165, %cst_62 {dimension_numbers = #tpu.dot_dimension_numbers<[1], [0], [0], [1], [0, 0, 1, 1], [], []>} : vector<32x64xf32>, vector<64x64xf32>, vector<32x64xf32> -> vector<32x64xf32>
    %167 = arith.addf %162, %166 : vector<32x64xf32>
    %168 = vector.extract_strided_slice %135 {offsets = [10, 0], sizes = [32, 64], strides = [1, 1]} : vector<44x64xf32> to vector<32x64xf32>
    %c6_63 = arith.constant 6 : index
    %c0_64 = arith.constant 0 : index
    %c0_65 = arith.constant 0 : index
    %169 = vector.load %arg6[%c6_63, %c0_64, %c0_65] : memref<9x64x64xf32, #tpu.memory_space<vmem>>, vector<1x64x64xf32>
    %170 = vector.shape_cast %169 : vector<1x64x64xf32> to vector<64x64xf32>
    %cst_66 = arith.constant dense<0.000000e+00> : vector<32x64xf32>
    %171 = tpu.matmul %168, %170, %cst_66 {dimension_numbers = #tpu.dot_dimension_numbers<[1], [0], [0], [1], [0, 0, 1, 1], [], []>} : vector<32x64xf32>, vector<64x64xf32>, vector<32x64xf32> -> vector<32x64xf32>
    %172 = arith.addf %167, %171 : vector<32x64xf32>
    %173 = vector.extract_strided_slice %135 {offsets = [11, 0], sizes = [32, 64], strides = [1, 1]} : vector<44x64xf32> to vector<32x64xf32>
    %c7 = arith.constant 7 : index
    %c0_67 = arith.constant 0 : index
    %c0_68 = arith.constant 0 : index
    %174 = vector.load %arg6[%c7, %c0_67, %c0_68] : memref<9x64x64xf32, #tpu.memory_space<vmem>>, vector<1x64x64xf32>
    %175 = vector.shape_cast %174 : vector<1x64x64xf32> to vector<64x64xf32>
    %cst_69 = arith.constant dense<0.000000e+00> : vector<32x64xf32>
    %176 = tpu.matmul %173, %175, %cst_69 {dimension_numbers = #tpu.dot_dimension_numbers<[1], [0], [0], [1], [0, 0, 1, 1], [], []>} : vector<32x64xf32>, vector<64x64xf32>, vector<32x64xf32> -> vector<32x64xf32>
    %177 = arith.addf %172, %176 : vector<32x64xf32>
    %178 = vector.extract_strided_slice %135 {offsets = [12, 0], sizes = [32, 64], strides = [1, 1]} : vector<44x64xf32> to vector<32x64xf32>
    %c8 = arith.constant 8 : index
    %c0_70 = arith.constant 0 : index
    %c0_71 = arith.constant 0 : index
    %179 = vector.load %arg6[%c8, %c0_70, %c0_71] : memref<9x64x64xf32, #tpu.memory_space<vmem>>, vector<1x64x64xf32>
    %180 = vector.shape_cast %179 : vector<1x64x64xf32> to vector<64x64xf32>
    %cst_72 = arith.constant dense<0.000000e+00> : vector<32x64xf32>
    %181 = tpu.matmul %178, %180, %cst_72 {dimension_numbers = #tpu.dot_dimension_numbers<[1], [0], [0], [1], [0, 0, 1, 1], [], []>} : vector<32x64xf32>, vector<64x64xf32>, vector<32x64xf32> -> vector<32x64xf32>
    %182 = arith.addf %177, %181 : vector<32x64xf32>
    %cst_73 = arith.constant 0.000000e+00 : f32
    %183 = vector.broadcast %cst_73 : f32 to vector<32x64xf32>
    %184 = arith.maximumf %182, %183 : vector<32x64xf32>
    %185 = vector.extract_strided_slice %184 {offsets = [0, 0], sizes = [1, 64], strides = [1, 1]} : vector<32x64xf32> to vector<1x64xf32>
    %186 = vector.extract_strided_slice %184 {offsets = [1, 0], sizes = [1, 64], strides = [1, 1]} : vector<32x64xf32> to vector<1x64xf32>
    %187 = vector.extract_strided_slice %184 {offsets = [5, 0], sizes = [1, 64], strides = [1, 1]} : vector<32x64xf32> to vector<1x64xf32>
    %188 = vector.extract_strided_slice %184 {offsets = [6, 0], sizes = [1, 64], strides = [1, 1]} : vector<32x64xf32> to vector<1x64xf32>
    %189 = tpu.concatenate %185, %186, %187, %188 in 1 : vector<1x64xf32>, vector<1x64xf32>, vector<1x64xf32>, vector<1x64xf32> -> vector<1x256xf32>
    %190 = vector.extract_strided_slice %184 {offsets = [25, 0], sizes = [1, 64], strides = [1, 1]} : vector<32x64xf32> to vector<1x64xf32>
    %191 = vector.extract_strided_slice %184 {offsets = [26, 0], sizes = [1, 64], strides = [1, 1]} : vector<32x64xf32> to vector<1x64xf32>
    %192 = vector.extract_strided_slice %184 {offsets = [30, 0], sizes = [1, 64], strides = [1, 1]} : vector<32x64xf32> to vector<1x64xf32>
    %193 = vector.extract_strided_slice %184 {offsets = [31, 0], sizes = [1, 64], strides = [1, 1]} : vector<32x64xf32> to vector<1x64xf32>
    %194 = tpu.concatenate %190, %191, %192, %193 in 1 : vector<1x64xf32>, vector<1x64xf32>, vector<1x64xf32>, vector<1x64xf32> -> vector<1x256xf32>
    %195 = tpu.concatenate %189, %194 in 0 : vector<1x256xf32>, vector<1x256xf32> -> vector<2x256xf32>
    %c0_74 = arith.constant 0 : index
    %c0_75 = arith.constant 0 : index
    %196 = vector.load %arg8[%c0_74, %c0_75] : memref<256x128xf32, #tpu.memory_space<vmem>>, vector<256x128xf32>
    %cst_76 = arith.constant dense<0.000000e+00> : vector<2x128xf32>
    %197 = tpu.matmul %195, %196, %cst_76 {dimension_numbers = #tpu.dot_dimension_numbers<[1], [0], [0], [1], [0, 0, 1, 1], [], []>} : vector<2x256xf32>, vector<256x128xf32>, vector<2x128xf32> -> vector<2x128xf32>
    %c0_77 = arith.constant 0 : index
    %c0_78 = arith.constant 0 : index
    %198 = vector.load %arg9[%c0_77, %c0_78] : memref<1x128xf32, #tpu.memory_space<vmem>>, vector<1x128xf32>
    %199 = vector.broadcast %198 : vector<1x128xf32> to vector<2x128xf32>
    %200 = arith.addf %197, %199 : vector<2x128xf32>
    %cst_79 = arith.constant 0.000000e+00 : f32
    %201 = vector.broadcast %cst_79 : f32 to vector<2x128xf32>
    %202 = arith.maximumf %200, %201 : vector<2x128xf32>
    %c0_80 = arith.constant 0 : index
    %c0_81 = arith.constant 0 : index
    %203 = vector.load %arg10[%c0_80, %c0_81] : memref<128x4xf32, #tpu.memory_space<vmem>>, vector<128x4xf32>
    %cst_82 = arith.constant dense<0.000000e+00> : vector<2x4xf32>
    %204 = tpu.matmul %202, %203, %cst_82 {dimension_numbers = #tpu.dot_dimension_numbers<[1], [0], [0], [1], [0, 0, 1, 1], [], []>} : vector<2x128xf32>, vector<128x4xf32>, vector<2x4xf32> -> vector<2x4xf32>
    %c0_83 = arith.constant 0 : index
    %c0_84 = arith.constant 0 : index
    %205 = vector.load %arg11[%c0_83, %c0_84] : memref<1x4xf32, #tpu.memory_space<vmem>>, vector<1x4xf32>
    %206 = vector.broadcast %205 : vector<1x4xf32> to vector<2x4xf32>
    %207 = arith.addf %204, %206 : vector<2x4xf32>
    %c0_85 = arith.constant 0 : index
    %c0_86 = arith.constant 0 : index
    %208 = vector.load %arg12[%c0_85, %c0_86] : memref<2x4xf32, #tpu.memory_space<vmem>>, vector<2x4xf32>
    tpu.vector_store %arg12[%c0_85, %c0_86], %207 {strides = array<i32>} : memref<2x4xf32, #tpu.memory_space<vmem>>, vector<2x4xf32>,
    return
  }
  func.func @transform_0(%arg0: i32) -> (i32, i32) {
    %c0_i32 = arith.constant 0 : i32
    %c0_i32_0 = arith.constant 0 : i32
    %c0_i32_1 = arith.constant 0 : i32
    return %c0_i32, %c0_i32_0 : i32, i32
  }
  func.func @transform_1(%arg0: i32) -> (i32, i32) {
    %c0_i32 = arith.constant 0 : i32
    %c0_i32_0 = arith.constant 0 : i32
    %c0_i32_1 = arith.constant 0 : i32
    return %c0_i32, %c0_i32_0 : i32, i32
  }
  func.func @transform_2(%arg0: i32) -> (i32, i32) {
    %c0_i32 = arith.constant 0 : i32
    %c0_i32_0 = arith.constant 0 : i32
    %c0_i32_1 = arith.constant 0 : i32
    return %c0_i32, %c0_i32_0 : i32, i32
  }
  func.func @transform_3(%arg0: i32) -> (i32, i32, i32) {
    %c0_i32 = arith.constant 0 : i32
    %c0_i32_0 = arith.constant 0 : i32
    %c0_i32_1 = arith.constant 0 : i32
    %c0_i32_2 = arith.constant 0 : i32
    return %c0_i32, %c0_i32_0, %c0_i32_1 : i32, i32, i32
  }
  func.func @transform_4(%arg0: i32) -> (i32, i32) {
    %c0_i32 = arith.constant 0 : i32
    %c0_i32_0 = arith.constant 0 : i32
    %c0_i32_1 = arith.constant 0 : i32
    return %c0_i32, %c0_i32_0 : i32, i32
  }
  func.func @transform_5(%arg0: i32) -> (i32, i32, i32) {
    %c0_i32 = arith.constant 0 : i32
    %c0_i32_0 = arith.constant 0 : i32
    %c0_i32_1 = arith.constant 0 : i32
    %c0_i32_2 = arith.constant 0 : i32
    return %c0_i32, %c0_i32_0, %c0_i32_1 : i32, i32, i32
  }
  func.func @transform_6(%arg0: i32) -> (i32, i32) {
    %c0_i32 = arith.constant 0 : i32
    %c0_i32_0 = arith.constant 0 : i32
    %c0_i32_1 = arith.constant 0 : i32
    return %c0_i32, %c0_i32_0 : i32, i32
  }
  func.func @transform_7(%arg0: i32) -> (i32, i32) {
    %c0_i32 = arith.constant 0 : i32
    %c0_i32_0 = arith.constant 0 : i32
    %c0_i32_1 = arith.constant 0 : i32
    return %c0_i32, %c0_i32_0 : i32, i32
  }
  func.func @transform_8(%arg0: i32) -> (i32, i32) {
    %c0_i32 = arith.constant 0 : i32
    %c0_i32_0 = arith.constant 0 : i32
    %c0_i32_1 = arith.constant 0 : i32
    return %c0_i32, %c0_i32_0 : i32, i32
  }
  func.func @transform_9(%arg0: i32) -> (i32, i32) {
    %c0_i32 = arith.constant 0 : i32
    %c0_i32_0 = arith.constant 0 : i32
    %c0_i32_1 = arith.constant 0 : i32
    return %c0_i32, %c0_i32_0 : i32, i32
  }
  func.func @transform_10(%arg0: i32) -> (i32, i32) {
    %c0_i32 = arith.constant 0 : i32
    %c0_i32_0 = arith.constant 0 : i32
    %c0_i32_1 = arith.constant 0 : i32
    return %c0_i32, %c0_i32_0 : i32, i32
  }
  func.func @transform_11(%arg0: i32) -> (i32, i32) {
    %c0_i32 = arith.constant 0 : i32
    %c0_i32_0 = arith.constant 0 : i32
    %c0_i32_1 = arith.constant 0 : i32
    return %c0_i32, %c0_i32_0 : i32, i32
  }
}

</mosaic_0001>

<llo_original>
// kernel: qnetwork_forward.1
$region0: #{qnetwork_forward.1}
  #allocation0 [shape = 'u32[]', space=smem, size = 0x4, offset = 0x4, fixed_abs, tag = 'smem constant byte address 0x4 - core index']
  #allocation1 [shape = 'u32[144,128]{1,0:T(1,128)}', space=vmem, size = 0x12000, scoped, tag = 'internal scratch']
  #allocation2 [shape = 'f32[50,128]{1,0:T(8,128)}', space=vmem, size = 0x7000, scoped, tag = 'scratch operand']
  %s0 = inlined_call_operand.vmem [shape: f32[72,384], index: 0, kind: input, shape index: {}]
  %s1 = inlined_call_operand.vmem [shape: f32[384,32], index: 1, kind: input, shape index: {}]
  %s2 = inlined_call_operand.vmem [shape: f32[1,32], index: 2, kind: input, shape index: {}]
  %s3 = inlined_call_operand.vmem [shape: f32[4,128,64], index: 3, kind: input, shape index: {}]
  %s4 = inlined_call_operand.vmem [shape: f32[1,64], index: 4, kind: input, shape index: {}]
  %s5 = inlined_call_operand.vmem [shape: f32[9,64,64], index: 5, kind: input, shape index: {}]
  %s6 = inlined_call_operand.vmem [shape: f32[1,64], index: 6, kind: input, shape index: {}]
  %s7 = inlined_call_operand.vmem [shape: f32[256,128], index: 7, kind: input, shape index: {}]
  %s8 = inlined_call_operand.vmem [shape: f32[1,128], index: 8, kind: input, shape index: {}]
  %s9 = inlined_call_operand.vmem [shape: f32[128,4], index: 9, kind: input, shape index: {}]
  %s10 = inlined_call_operand.vmem [shape: f32[1,4], index: 10, kind: input, shape index: {}]
  %s11 = inlined_call_operand.hbm [shape: f32[2,4], index: 11, kind: output, shape index: {}]
  %s12 = sld [smem:[#allocation0]]
  $region54: #{qnetwork_forward.1} parent=0
    _
  %s14 = ssub.s32 1, %s12
  %s15 = scalar_select 0, %s14, %s12
  $region1: #{qnetwork_forward.1} parent=0
    #allocation3 [shape = 'u8[1024]{0}', space=vmem, size = 0x400, scoped, tag = 'output window, operand 0, single buffered']
    #allocation4 [shape = 's32[1]{0}', space=sflag, size = 0x4, scoped, tag = 'scoped memory for qnetwork_forward.1']
    %16 = vsyncpa [#allocation4], 0
    // Predicated region
    $region2: #{qnetwork_forward.1} parent=1 // pred_check
      _
    $region3: #{qnetwork_forward.1} parent=1 // pred_check_branch
      %18 = sbr.rel (0) target = $region5
    $region4: #{qnetwork_forward.1} parent=1 // pred_region
      _
    $region5: #{qnetwork_forward.1} parent=1 // pred_fallthru
      _
    // Predicated region
    $region6: #{qnetwork_forward.1} parent=1 // pred_check
      _
    $region7: #{qnetwork_forward.1} parent=1 // pred_check_branch
      %20 = sbr.rel (0) target = $region9
    $region8: #{qnetwork_forward.1} parent=1 // pred_region
      _
    $region9: #{qnetwork_forward.1} parent=1 // pred_fallthru
      _
    // Predicated region
    $region10: #{qnetwork_forward.1} parent=1 // pred_check
      _
    $region11: #{qnetwork_forward.1} parent=1 // pred_check_branch
      %22 = sbr.rel (0) target = $region13
    $region12: #{qnetwork_forward.1} parent=1 // pred_region
      _
    $region13: #{qnetwork_forward.1} parent=1 // pred_fallthru
      _
    // Predicated region
    $region14: #{qnetwork_forward.1} parent=1 // pred_check
      _
    $region15: #{qnetwork_forward.1} parent=1 // pred_check_branch
      %24 = sbr.rel (0) target = $region17
    $region16: #{qnetwork_forward.1} parent=1 // pred_region
      _
    $region17: #{qnetwork_forward.1} parent=1 // pred_fallthru
      _
    // Predicated region
    $region18: #{qnetwork_forward.1} parent=1 // pred_check
      _
    $region19: #{qnetwork_forward.1} parent=1 // pred_check_branch
      %26 = sbr.rel (0) target = $region21
    $region20: #{qnetwork_forward.1} parent=1 // pred_region
      _
    $region21: #{qnetwork_forward.1} parent=1 // pred_fallthru
      _
    // Predicated region
    $region22: #{qnetwork_forward.1} parent=1 // pred_check
      _
    $region23: #{qnetwork_forward.1} parent=1 // pred_check_branch
      %28 = sbr.rel (0) target = $region25
    $region24: #{qnetwork_forward.1} parent=1 // pred_region
      _
    $region25: #{qnetwork_forward.1} parent=1 // pred_fallthru
      _
    // Predicated region
    $region26: #{qnetwork_forward.1} parent=1 // pred_check
      _
    $region27: #{qnetwork_forward.1} parent=1 // pred_check_branch
      %30 = sbr.rel (0) target = $region29
    $region28: #{qnetwork_forward.1} parent=1 // pred_region
      _
    $region29: #{qnetwork_forward.1} parent=1 // pred_fallthru
      _
    // Predicated region
    $region30: #{qnetwork_forward.1} parent=1 // pred_check
      _
    $region31: #{qnetwork_forward.1} parent=1 // pred_check_branch
      %32 = sbr.rel (0) target = $region33
    $region32: #{qnetwork_forward.1} parent=1 // pred_region
      _
    $region33: #{qnetwork_forward.1} parent=1 // pred_fallthru
      _
    // Predicated region
    $region34: #{qnetwork_forward.1} parent=1 // pred_check
      _
    $region35: #{qnetwork_forward.1} parent=1 // pred_check_branch
      %34 = sbr.rel (0) target = $region37
    $region36: #{qnetwork_forward.1} parent=1 // pred_region
      _
    $region37: #{qnetwork_forward.1} parent=1 // pred_fallthru
      _
    // Predicated region
    $region38: #{qnetwork_forward.1} parent=1 // pred_check
      _
    $region39: #{qnetwork_forward.1} parent=1 // pred_check_branch
      %36 = sbr.rel (0) target = $region41
    $region40: #{qnetwork_forward.1} parent=1 // pred_region
      _
    $region41: #{qnetwork_forward.1} parent=1 // pred_fallthru
      _
    // Predicated region
    $region42: #{qnetwork_forward.1} parent=1 // pred_check
      _
    $region43: #{qnetwork_forward.1} parent=1 // pred_check_branch
      %38 = sbr.rel (0) target = $region45
    $region44: #{qnetwork_forward.1} parent=1 // pred_region
      _
    $region45: #{qnetwork_forward.1} parent=1 // pred_fallthru
      _
    %v39 = vld [vmem:[%s0] sm:$0xff]
    %v40 = vld [vmem:[%s0 + $0x8] sm:$0xff]
    %v41 = vld [vmem:[%s0 + $0x10] sm:$0xff]
    %v42 = vld [vmem:[%s0 + $0x18] sm:$0xff]
    %v43 = vld [vmem:[%s0 + $0x20] sm:$0xff]
    %v44 = vld [vmem:[%s0 + $0x28] sm:$0xff]
    %v45 = vld [vmem:[%s0 + $0x30] sm:$0xff]
    %v46 = vld [vmem:[%s0 + $0x38] sm:$0xff]
    %v47 = vld [vmem:[%s0 + $0x40] sm:$0xff]
    %v48 = vld [vmem:[%s0 + $0x48] sm:$0xff]
    %v49 = vld [vmem:[%s0 + $0x50] sm:$0xff]
    %v50 = vld [vmem:[%s0 + $0x58] sm:$0xff]
    %v51 = vld [vmem:[%s0 + $0x60] sm:$0xff]
    %v52 = vld [vmem:[%s0 + $0x68] sm:$0xff]
    %v53 = vld [vmem:[%s0 + $0x70] sm:$0xff]
    %v54 = vld [vmem:[%s0 + $0x78] sm:$0xff]
    %v55 = vld [vmem:[%s0 + $0x80] sm:$0xff]
    %v56 = vld [vmem:[%s0 + $0x88] sm:$0xff]
    %v57 = vld [vmem:[%s0 + $0x90] sm:$0xff]
    %v58 = vld [vmem:[%s0 + $0x98] sm:$0xff]
    %v59 = vld [vmem:[%s0 + $0xa0] sm:$0xff]
    %v60 = vld [vmem:[%s0 + $0xa8] sm:$0xff]
    %v61 = vld [vmem:[%s0 + $0xb0] sm:$0xff]
    %v62 = vld [vmem:[%s0 + $0xb8] sm:$0xff]
    %v63 = vld [vmem:[%s0 + $0xc0] sm:$0xff]
    %v64 = vld [vmem:[%s0 + $0xc8] sm:$0xff]
    %v65 = vld [vmem:[%s0 + $0xd0] sm:$0xff]
    %v66 = vld [vmem:[%s1] sm:$0xff]
    %v67 = vld [vmem:[%s1 + $0x8] sm:$0xff]
    %v68 = vld [vmem:[%s1 + $0x10] sm:$0xff]
    %v69 = vld [vmem:[%s1 + $0x18] sm:$0xff]
    %v70 = vld [vmem:[%s1 + $0x20] sm:$0xff]
    %v71 = vld [vmem:[%s1 + $0x28] sm:$0xff]
    %v72 = vld [vmem:[%s1 + $0x30] sm:$0xff]
    %v73 = vld [vmem:[%s1 + $0x38] sm:$0xff]
    %v74 = vld [vmem:[%s1 + $0x40] sm:$0xff]
    %v75 = vld [vmem:[%s1 + $0x48] sm:$0xff]
    %v76 = vld [vmem:[%s1 + $0x50] sm:$0xff]
    %v77 = vld [vmem:[%s1 + $0x58] sm:$0xff]
    %v78 = vld [vmem:[%s1 + $0x60] sm:$0xff]
    %v79 = vld [vmem:[%s1 + $0x68] sm:$0xff]
    %v80 = vld [vmem:[%s1 + $0x70] sm:$0xff]
    %v81 = vld [vmem:[%s1 + $0x78] sm:$0xff]
    %v82 = vld [vmem:[%s1 + $0x80] sm:$0xff]
    %v83 = vld [vmem:[%s1 + $0x88] sm:$0xff]
    %v84 = vld [vmem:[%s1 + $0x90] sm:$0xff]
    %v85 = vld [vmem:[%s1 + $0x98] sm:$0xff]
    %v86 = vld [vmem:[%s1 + $0xa0] sm:$0xff]
    %v87 = vld [vmem:[%s1 + $0xa8] sm:$0xff]
    %v88 = vld [vmem:[%s1 + $0xb0] sm:$0xff]
    %v89 = vld [vmem:[%s1 + $0xb8] sm:$0xff]
    %v90 = vld [vmem:[%s1 + $0xc0] sm:$0xff]
    %v91 = vld [vmem:[%s1 + $0xc8] sm:$0xff]
    %v92 = vld [vmem:[%s1 + $0xd0] sm:$0xff]
    %v93 = vld [vmem:[%s1 + $0xd8] sm:$0xff]
    %v94 = vld [vmem:[%s1 + $0xe0] sm:$0xff]
    %v95 = vld [vmem:[%s1 + $0xe8] sm:$0xff]
    %v96 = vld [vmem:[%s1 + $0xf0] sm:$0xff]
    %v97 = vld [vmem:[%s1 + $0xf8] sm:$0xff]
    %v98 = vld [vmem:[%s1 + $0x100] sm:$0xff]
    %v99 = vld [vmem:[%s1 + $0x108] sm:$0xff]
    %v100 = vld [vmem:[%s1 + $0x110] sm:$0xff]
    %v101 = vld [vmem:[%s1 + $0x118] sm:$0xff]
    %v102 = vld [vmem:[%s1 + $0x120] sm:$0xff]
    %v103 = vld [vmem:[%s1 + $0x128] sm:$0xff]
    %v104 = vld [vmem:[%s1 + $0x130] sm:$0xff]
    %v105 = vld [vmem:[%s1 + $0x138] sm:$0xff]
    %v106 = vld [vmem:[%s1 + $0x140] sm:$0xff]
    %v107 = vld [vmem:[%s1 + $0x148] sm:$0xff]
    %v108 = vld [vmem:[%s1 + $0x150] sm:$0xff]
    %v109 = vld [vmem:[%s1 + $0x158] sm:$0xff]
    %v110 = vld [vmem:[%s1 + $0x160] sm:$0xff]
    %v111 = vld [vmem:[%s1 + $0x168] sm:$0xff]
    %v112 = vld [vmem:[%s1 + $0x170] sm:$0xff]
    %v113 = vld [vmem:[%s1 + $0x178] sm:$0xff]
    %v114 = vld [vmem:[%s2] sm:$0x1]
    %v116 = vlaneseq
    %v117 = vshrl.u32 %v116, 7
    %v118 = vsub.s32 0, %v117
    %v119 = vrot.slane %v114, %v118
    %121 = vmatprep.subr.mxu0 0.0
    %122 = vmatpush1.msra.mxu0 %v66
    %123 = vmatprep.subr.mxu0 0.0
    %124 = vmatpush1.msra.mxu0 %v67
    %125 = vmatprep.subr.mxu0 0.0
    %126 = vmatpush1.msra.mxu0 %v68
    %127 = vmatprep.subr.mxu0 0.0
    %128 = vmatpush1.msra.mxu0 %v69
    %129 = vmatprep.subr.mxu0 0.0
    %130 = vmatpush1.msra.mxu0 %v70
    %131 = vmatprep.subr.mxu0 0.0
    %132 = vmatpush1.msra.mxu0 %v71
    %133 = vmatprep.subr.mxu0 0.0
    %134 = vmatpush1.msra.mxu0 %v72
    %135 = vmatprep.subr.mxu0 0.0
    %136 = vmatpush1.msra.mxu0 %v73
    %137 = vmatprep.subr.mxu0 0.0
    %138 = vmatpush1.msra.mxu0 %v74
    %139 = vmatprep.subr.mxu0 0.0
    %140 = vmatpush1.msra.mxu0 %v75
    %141 = vmatprep.subr.mxu0 0.0
    %142 = vmatpush1.msra.mxu0 %v76
    %143 = vmatprep.subr.mxu0 0.0
    %144 = vmatpush1.msra.mxu0 %v77
    %145 = vmatprep.subr.mxu0 0.0
    %146 = vmatpush1.msra.mxu0 %v78
    %147 = vmatprep.subr.mxu0 0.0
    %148 = vmatpush1.msra.mxu0 %v79
    %149 = vmatprep.subr.mxu0 0.0
    %150 = vmatpush1.msra.mxu0 %v80
    %151 = vmatprep.subr.mxu0 0.0
    %152 = vmatpush1.msra.mxu0 %v81
    %153 = vmatprep.subr.mxu0 0.0
    %154 = vmatpush1.msra.mxu0 %v82
    %155 = vmatprep.subr.mxu0 0.0
    %156 = vmatpush1.msra.mxu0 %v83
    %157 = vmatprep.subr.mxu0 0.0
    %158 = vmatpush1.msra.mxu0 %v84
    %159 = vmatprep.subr.mxu0 0.0
    %160 = vmatpush1.msra.mxu0 %v85
    %161 = vmatprep.subr.mxu0 0.0
    %162 = vmatpush1.msra.mxu0 %v86
    %163 = vmatprep.subr.mxu0 0.0
    %164 = vmatpush1.msra.mxu0 %v87
    %165 = vmatprep.subr.mxu0 0.0
    %166 = vmatpush1.msra.mxu0 %v88
    %167 = vmatprep.subr.mxu0 0.0
    %168 = vmatpush1.msra.mxu0 %v89
    %169 = vmatprep.subr.mxu0 0.0
    %170 = vmatpush1.msra.mxu0 %v90
    %171 = vmatprep.subr.mxu0 0.0
    %172 = vmatpush1.msra.mxu0 %v91
    %173 = vmatprep.subr.mxu0 0.0
    %174 = vmatpush1.msra.mxu0 %v92
    %175 = vmatprep.subr.mxu0 0.0
    %176 = vmatpush1.msra.mxu0 %v93
    %177 = vmatprep.subr.mxu0 0.0
    %178 = vmatpush1.msra.mxu0 %v94
    %179 = vmatprep.subr.mxu0 0.0
    %180 = vmatpush1.msra.mxu0 %v95
    %181 = vmatprep.subr.mxu0 0.0
    %182 = vmatpush1.msra.mxu0 %v96
    %183 = vmatprep.subr.mxu0 0.0
    %184 = vmatpush1.msra.mxu0 %v97
    %185 = vmatprep.mubr.f32.mxu0 %v40
    %186 = vmatmul.mubr.f32.gmra.mrb[0].mxu0 %v39
    %v187 = vpop.f32.mrb[0].mxu0
    %v188 = vadd.f32 %v119, %v187
    %v189 = vpop.f32.mrb[0].mxu0
    %190 = vmatprep.mubr.f32.mxu0 %v43
    %191 = vmatmul.mubr.f32.gmra.mrb[0].mxu0 %v42
    %v192 = vpop.f32.mrb[0].mxu0
    %v193 = vadd.f32 %v119, %v192
    %v194 = vpop.f32.mrb[0].mxu0
    %195 = vmatprep.mubr.f32.mxu0 %v46
    %196 = vmatmul.mubr.f32.gmra.mrb[0].mxu0 %v45
    %v197 = vpop.f32.mrb[0].mxu0
    %v198 = vadd.f32 %v119, %v197
    %v199 = vpop.f32.mrb[0].mxu0
    %200 = vmatprep.mubr.f32.mxu0 %v49
    %201 = vmatmul.mubr.f32.gmra.mrb[0].mxu0 %v48
    %v202 = vpop.f32.mrb[0].mxu0
    %v203 = vadd.f32 %v119, %v202
    %v204 = vpop.f32.mrb[0].mxu0
    %205 = vmatprep.mubr.f32.mxu0 %v52
    %206 = vmatmul.mubr.f32.gmra.mrb[0].mxu0 %v51
    %v207 = vpop.f32.mrb[0].mxu0
    %v208 = vadd.f32 %v119, %v207
    %v209 = vpop.f32.mrb[0].mxu0
    %210 = vmatprep.mubr.f32.mxu0 %v55
    %211 = vmatmul.mubr.f32.gmra.mrb[0].mxu0 %v54
    %v212 = vpop.f32.mrb[0].mxu0
    %v213 = vadd.f32 %v119, %v212
    %v214 = vpop.f32.mrb[0].mxu0
    %215 = vmatprep.mubr.f32.mxu0 %v58
    %216 = vmatmul.mubr.f32.gmra.mrb[0].mxu0 %v57
    %v217 = vpop.f32.mrb[0].mxu0
    %v218 = vadd.f32 %v119, %v217
    %v219 = vpop.f32.mrb[0].mxu0
    %220 = vmatprep.mubr.f32.mxu0 %v61
    %221 = vmatmul.mubr.f32.gmra.mrb[0].mxu0 %v60
    %v222 = vpop.f32.mrb[0].mxu0
    %v223 = vadd.f32 %v119, %v222
    %v224 = vpop.f32.mrb[0].mxu0
    %225 = vmatprep.mubr.f32.mxu0 %v64
    %226 = vmatmul.mubr.f32.gmra.mrb[0].mxu0 %v63
    %v227 = vpop.f32.mrb[0].mxu0
    %v228 = vadd.f32 %v119, %v227
    %v229 = vpop.f32.mrb[0].mxu0
    %230 = vdwg.mxu0
    %231 = vmatprep.subr.mxu0 0.0
    %232 = vmatpush1.msra.mxu0 %v98
    %233 = vmatprep.subr.mxu0 0.0
    %234 = vmatpush1.msra.mxu0 %v99
    %235 = vmatprep.subr.mxu0 0.0
    %236 = vmatpush1.msra.mxu0 %v100
    %237 = vmatprep.subr.mxu0 0.0
    %238 = vmatpush1.msra.mxu0 %v101
    %239 = vmatprep.subr.mxu0 0.0
    %240 = vmatpush1.msra.mxu0 %v102
    %241 = vmatprep.subr.mxu0 0.0
    %242 = vmatpush1.msra.mxu0 %v103
    %243 = vmatprep.subr.mxu0 0.0
    %244 = vmatpush1.msra.mxu0 %v104
    %245 = vmatprep.subr.mxu0 0.0
    %246 = vmatpush1.msra.mxu0 %v105
    %247 = vmatprep.subr.mxu0 0.0
    %248 = vmatpush1.msra.mxu0 %v106
    %249 = vmatprep.subr.mxu0 0.0
    %250 = vmatpush1.msra.mxu0 %v107
    %251 = vmatprep.subr.mxu0 0.0
    %252 = vmatpush1.msra.mxu0 %v108
    %253 = vmatprep.subr.mxu0 0.0
    %254 = vmatpush1.msra.mxu0 %v109
    %255 = vmatprep.subr.mxu0 0.0
    %256 = vmatpush1.msra.mxu0 %v110
    %257 = vmatprep.subr.mxu0 0.0
    %258 = vmatpush1.msra.mxu0 %v111
    %259 = vmatprep.subr.mxu0 0.0
    %260 = vmatpush1.msra.mxu0 %v112
    %261 = vmatprep.subr.mxu0 0.0
    %262 = vmatpush1.msra.mxu0 %v113
    %263 = vmatprep.subr.mxu0 0.0
    %264 = vmatpush1.msra.mxu0 0.0
    %265 = vmatprep.subr.mxu0 0.0
    %266 = vmatpush1.msra.mxu0 0.0
    %267 = vmatprep.subr.mxu0 0.0
    %268 = vmatpush1.msra.mxu0 0.0
    %269 = vmatprep.subr.mxu0 0.0
    %270 = vmatpush1.msra.mxu0 0.0
    %271 = vmatprep.subr.mxu0 0.0
    %272 = vmatpush1.msra.mxu0 0.0
    %273 = vmatprep.subr.mxu0 0.0
    %274 = vmatpush1.msra.mxu0 0.0
    %275 = vmatprep.subr.mxu0 0.0
    %276 = vmatpush1.msra.mxu0 0.0
    %277 = vmatprep.subr.mxu0 0.0
    %278 = vmatpush1.msra.mxu0 0.0
    %279 = vmatprep.subr.mxu0 0.0
    %280 = vmatpush1.msra.mxu0 0.0
    %281 = vmatprep.subr.mxu0 0.0
    %282 = vmatpush1.msra.mxu0 0.0
    %283 = vmatprep.subr.mxu0 0.0
    %284 = vmatpush1.msra.mxu0 0.0
    %285 = vmatprep.subr.mxu0 0.0
    %286 = vmatpush1.msra.mxu0 0.0
    %287 = vmatprep.subr.mxu0 0.0
    %288 = vmatpush1.msra.mxu0 0.0
    %289 = vmatprep.subr.mxu0 0.0
    %290 = vmatpush1.msra.mxu0 0.0
    %291 = vmatprep.subr.mxu0 0.0
    %292 = vmatpush1.msra.mxu0 0.0
    %293 = vmatprep.subr.mxu0 0.0
    %294 = vmatpush1.msra.mxu0 0.0
    %295 = vmatprep.mubr.f32.mxu0 0.0
    %296 = vmatmul.mubr.f32.gmra.mrb[0].mxu0 %v41
    %v297 = vpop.f32.mrb[0].mxu0
    %v298 = vadd.f32 %v188, %v297
    %v299 = vpop.f32.mrb[0].mxu0
    %300 = vmatprep.mubr.f32.mxu0 0.0
    %301 = vmatmul.mubr.f32.gmra.mrb[0].mxu0 %v44
    %v302 = vpop.f32.mrb[0].mxu0
    %v303 = vadd.f32 %v193, %v302
    %v304 = vpop.f32.mrb[0].mxu0
    %305 = vmatprep.mubr.f32.mxu0 0.0
    %306 = vmatmul.mubr.f32.gmra.mrb[0].mxu0 %v47
    %v307 = vpop.f32.mrb[0].mxu0
    %v308 = vadd.f32 %v198, %v307
    %v309 = vpop.f32.mrb[0].mxu0
    %310 = vmatprep.mubr.f32.mxu0 0.0
    %311 = vmatmul.mubr.f32.gmra.mrb[0].mxu0 %v50
    %v312 = vpop.f32.mrb[0].mxu0
    %v313 = vadd.f32 %v203, %v312
    %v314 = vpop.f32.mrb[0].mxu0
    %315 = vmatprep.mubr.f32.mxu0 0.0
    %316 = vmatmul.mubr.f32.gmra.mrb[0].mxu0 %v53
    %v317 = vpop.f32.mrb[0].mxu0
    %v318 = vadd.f32 %v208, %v317
    %v319 = vpop.f32.mrb[0].mxu0
    %320 = vmatprep.mubr.f32.mxu0 0.0
    %321 = vmatmul.mubr.f32.gmra.mrb[0].mxu0 %v56
    %v322 = vpop.f32.mrb[0].mxu0
    %v323 = vadd.f32 %v213, %v322
    %v324 = vpop.f32.mrb[0].mxu0
    %325 = vmatprep.mubr.f32.mxu0 0.0
    %326 = vmatmul.mubr.f32.gmra.mrb[0].mxu0 %v59
    %v327 = vpop.f32.mrb[0].mxu0
    %v328 = vadd.f32 %v218, %v327
    %v329 = vpop.f32.mrb[0].mxu0
    %330 = vmatprep.mubr.f32.mxu0 0.0
    %331 = vmatmul.mubr.f32.gmra.mrb[0].mxu0 %v62
    %v332 = vpop.f32.mrb[0].mxu0
    %v333 = vadd.f32 %v223, %v332
    %v334 = vpop.f32.mrb[0].mxu0
    %335 = vmatprep.mubr.f32.mxu0 0.0
    %336 = vmatmul.mubr.f32.gmra.mrb[0].mxu0 %v65
    %v337 = vpop.f32.mrb[0].mxu0
    %v338 = vadd.f32 %v228, %v337
    %v339 = vpop.f32.mrb[0].mxu0
    %340 = vdwg.mxu0
    %v341 = vmax.f32 %v298, 0.0
    %v342 = vmax.f32 %v303, 0.0
    %v343 = vmax.f32 %v308, 0.0
    %v344 = vmax.f32 %v313, 0.0
    %v345 = vmax.f32 %v318, 0.0
    %v346 = vmax.f32 %v323, 0.0
    %v347 = vmax.f32 %v328, 0.0
    %v348 = vmax.f32 %v333, 0.0
    %v349 = vmax.f32 %v338, 0.0
    %350 = vst [vmem:[#allocation2] sm:$0xff] 0.0
    %351 = vst [vmem:[#allocation2 + $0x8] sm:$0xff] 0.0
    %352 = vst [vmem:[#allocation2 + $0x10] sm:$0xff] 0.0
    %353 = vst [vmem:[#allocation2 + $0x18] sm:$0xff] 0.0
    %354 = vst [vmem:[#allocation2 + $0x20] sm:$0xff] 0.0
    %355 = vst [vmem:[#allocation2 + $0x28] sm:$0xff] 0.0
    %356 = vst [vmem:[#allocation2 + $0x30] sm:$0x3] 0.0
    %v358 = vrot.slane %v341, 1
    %359 = vrot.lane.b32.xlu0 %v358, 32
    %v360 = vpop.permute.xlu0 %359
    %v362 = vrot.slane %v341, 6
    %363 = vrot.lane.b32.xlu0 %v362, 64
    %v364 = vpop.permute.xlu0 %363
    %v366 = vrot.slane %v341, 7
    %367 = vrot.lane.b32.xlu0 %v366, 96
    %v368 = vpop.permute.xlu0 %367
    %vm370 = vcmask 261120
    %v371 = vsel %vm370, %v341, %v360
    %vm372 = vcmask 523264
    %v373 = vsel %vm372, %v371, %v364
    %vm374 = vcmask 785408
    %v375 = vsel %vm374, %v373, %v368
    %v377 = vrot.slane %v342, 6
    %378 = vrot.lane.b32.xlu0 %v377, 64
    %v379 = vpop.permute.xlu0 %378
    %v381 = vrot.slane %v342, 7
    %382 = vrot.lane.b32.xlu0 %v381, 96
    %v383 = vpop.permute.xlu0 %382
    %v385 = vsel %vm372, %v371, %v379
    %v386 = vsel %vm374, %v385, %v383
    %v388 = vrot.slane %v386, 1
    %v390 = vrot.slane %v386, 2
    %vm392 = vcmask 1040384
    %v393 = vsel %vm392, %v375, %v388
    %vm394 = vcmask 1041408
    %v395 = vsel %vm394, %v393, %v390
    %396 = vst [vmem:[#allocation2 + $0x6] sm:$0x7] %v395
    %v397 = vrot.slane %v342, 1
    %398 = vrot.lane.b32.xlu0 %v397, 32
    %v399 = vpop.permute.xlu0 %398
    %v402 = vrot.slane %v343, 6
    %403 = vrot.lane.b32.xlu0 %v402, 64
    %v404 = vpop.permute.xlu0 %403
    %v406 = vrot.slane %v343, 7
    %407 = vrot.lane.b32.xlu0 %v406, 96
    %v408 = vpop.permute.xlu0 %407
    %v410 = vsel %vm370, %v342, %v399
    %v411 = vsel %vm372, %v410, %v404
    %v412 = vsel %vm374, %v411, %v408
    %v413 = vrot.slane %v343, 1
    %414 = vrot.lane.b32.xlu0 %v413, 32
    %v415 = vpop.permute.xlu0 %414
    %v417 = vsel %vm370, %v343, %v415
    %v418 = vsel %vm372, %v417, %v404
    %v419 = vsel %vm374, %v418, %v408
    %v421 = vrot.slane %v412, 4
    %v423 = vrot.slane %v412, 5
    %v426 = vrot.slane %v419, 6
    %v428 = vsel %vm392, %v421, %v423
    %v429 = vsel %vm394, %v428, %v426
    %430 = vst [vmem:[#allocation2 + $0xb] sm:$0x7] %v429
    %v432 = vrot.slane %v344, 1
    %433 = vrot.lane.b32.xlu0 %v432, 32
    %v434 = vpop.permute.xlu0 %433
    %v436 = vrot.slane %v344, 6
    %437 = vrot.lane.b32.xlu0 %v436, 64
    %v438 = vpop.permute.xlu0 %437
    %v440 = vrot.slane %v344, 7
    %441 = vrot.lane.b32.xlu0 %v440, 96
    %v442 = vpop.permute.xlu0 %441
    %v444 = vsel %vm370, %v344, %v434
    %v445 = vsel %vm372, %v444, %v438
    %v446 = vsel %vm374, %v445, %v442
    %v448 = vrot.slane %v345, 6
    %449 = vrot.lane.b32.xlu0 %v448, 64
    %v450 = vpop.permute.xlu0 %449
    %v452 = vrot.slane %v345, 7
    %453 = vrot.lane.b32.xlu0 %v452, 96
    %v454 = vpop.permute.xlu0 %453
    %v456 = vsel %vm372, %v444, %v450
    %v457 = vsel %vm374, %v456, %v454
    %v459 = vrot.slane %v457, 1
    %v461 = vrot.slane %v457, 2
    %v463 = vsel %vm392, %v446, %v459
    %v464 = vsel %vm394, %v463, %v461
    %465 = vst [vmem:[#allocation2 + $0x10] sm:$0x7] %v464
    %v466 = vrot.slane %v345, 1
    %467 = vrot.lane.b32.xlu0 %v466, 32
    %v468 = vpop.permute.xlu0 %467
    %v471 = vrot.slane %v346, 6
    %472 = vrot.lane.b32.xlu0 %v471, 64
    %v473 = vpop.permute.xlu0 %472
    %v475 = vrot.slane %v346, 7
    %476 = vrot.lane.b32.xlu0 %v475, 96
    %v477 = vpop.permute.xlu0 %476
    %v479 = vsel %vm370, %v345, %v468
    %v480 = vsel %vm372, %v479, %v473
    %v481 = vsel %vm374, %v480, %v477
    %v482 = vrot.slane %v346, 1
    %483 = vrot.lane.b32.xlu0 %v482, 32
    %v484 = vpop.permute.xlu0 %483
    %v486 = vsel %vm370, %v346, %v484
    %v487 = vsel %vm372, %v486, %v473
    %v488 = vsel %vm374, %v487, %v477
    %v490 = vrot.slane %v481, 4
    %v492 = vrot.slane %v481, 5
    %v495 = vrot.slane %v488, 6
    %v497 = vsel %vm392, %v490, %v492
    %v498 = vsel %vm394, %v497, %v495
    %499 = vst [vmem:[#allocation2 + $0x1f] sm:$0x7] %v498
    %v501 = vrot.slane %v347, 1
    %502 = vrot.lane.b32.xlu0 %v501, 32
    %v503 = vpop.permute.xlu0 %502
    %v505 = vrot.slane %v347, 6
    %506 = vrot.lane.b32.xlu0 %v505, 64
    %v507 = vpop.permute.xlu0 %506
    %v509 = vrot.slane %v347, 7
    %510 = vrot.lane.b32.xlu0 %v509, 96
    %v511 = vpop.permute.xlu0 %510
    %v513 = vsel %vm370, %v347, %v503
    %v514 = vsel %vm372, %v513, %v507
    %v515 = vsel %vm374, %v514, %v511
    %v517 = vrot.slane %v348, 6
    %518 = vrot.lane.b32.xlu0 %v517, 64
    %v519 = vpop.permute.xlu0 %518
    %v521 = vrot.slane %v348, 7
    %522 = vrot.lane.b32.xlu0 %v521, 96
    %v523 = vpop.permute.xlu0 %522
    %v525 = vsel %vm372, %v513, %v519
    %v526 = vsel %vm374, %v525, %v523
    %v528 = vrot.slane %v526, 1
    %v530 = vrot.slane %v526, 2
    %v532 = vsel %vm392, %v515, %v528
    %v533 = vsel %vm394, %v532, %v530
    %534 = vst [vmem:[#allocation2 + $0x24] sm:$0x7] %v533
    %v535 = vrot.slane %v348, 1
    %536 = vrot.lane.b32.xlu0 %v535, 32
    %v537 = vpop.permute.xlu0 %536
    %v540 = vrot.slane %v349, 6
    %541 = vrot.lane.b32.xlu0 %v540, 64
    %v542 = vpop.permute.xlu0 %541
    %v544 = vrot.slane %v349, 7
    %545 = vrot.lane.b32.xlu0 %v544, 96
    %v546 = vpop.permute.xlu0 %545
    %v548 = vsel %vm370, %v348, %v537
    %v549 = vsel %vm372, %v548, %v542
    %v550 = vsel %vm374, %v549, %v546
    %v551 = vrot.slane %v349, 1
    %552 = vrot.lane.b32.xlu0 %v551, 32
    %v553 = vpop.permute.xlu0 %552
    %v555 = vsel %vm370, %v349, %v553
    %v556 = vsel %vm372, %v555, %v542
    %v557 = vsel %vm374, %v556, %v546
    %v559 = vrot.slane %v550, 4
    %v561 = vrot.slane %v550, 5
    %v564 = vrot.slane %v557, 6
    %v566 = vsel %vm392, %v559, %v561
    %v567 = vsel %vm394, %v566, %v564
    %568 = vst [vmem:[#allocation2 + $0x29] sm:$0x7] %v567
    %v569 = vld [vmem:[#allocation2] sm:$0xff]
    %v570 = vld [vmem:[#allocation2 + $0x8] sm:$0xff]
    %v571 = vld [vmem:[#allocation2 + $0x10] sm:$0xff]
    %v572 = vld [vmem:[#allocation2 + $0x18] sm:$0xff]
    %v573 = vld [vmem:[#allocation2 + $0x20] sm:$0xff]
    %v574 = vld [vmem:[#allocation2 + $0x28] sm:$0xf]
    %v575 = vld [vmem:[%s3] sm:$0xff]
    %v576 = vld [vmem:[%s3 + $0x8] sm:$0xff]
    %v577 = vld [vmem:[%s3 + $0x10] sm:$0xff]
    %v578 = vld [vmem:[%s3 + $0x18] sm:$0xff]
    %v579 = vld [vmem:[%s3 + $0x20] sm:$0xff]
    %v580 = vld [vmem:[%s3 + $0x28] sm:$0xff]
    %v581 = vld [vmem:[%s3 + $0x30] sm:$0xff]
    %v582 = vld [vmem:[%s3 + $0x38] sm:$0xff]
    %v583 = vld [vmem:[%s3 + $0x40] sm:$0xff]
    %v584 = vld [vmem:[%s3 + $0x48] sm:$0xff]
    %v585 = vld [vmem:[%s3 + $0x50] sm:$0xff]
    %v586 = vld [vmem:[%s3 + $0x58] sm:$0xff]
    %v587 = vld [vmem:[%s3 + $0x60] sm:$0xff]
    %v588 = vld [vmem:[%s3 + $0x68] sm:$0xff]
    %v589 = vld [vmem:[%s3 + $0x70] sm:$0xff]
    %v590 = vld [vmem:[%s3 + $0x78] sm:$0xff]
    %v591 = vld [vmem:[%s4] sm:$0x1]
    %v593 = vlaneseq
    %v594 = vshrl.u32 %v593, 7
    %v595 = vsub.s32 0, %v594
    %v596 = vrot.slane %v591, %v595
    %598 = vmatprep.subr.mxu0 0.0
    %599 = vmatpush1.msra.mxu0 %v575
    %600 = vmatprep.subr.mxu0 0.0
    %601 = vmatpush1.msra.mxu0 %v576
    %602 = vmatprep.subr.mxu0 0.0
    %603 = vmatpush1.msra.mxu0 %v577
    %604 = vmatprep.subr.mxu0 0.0
    %605 = vmatpush1.msra.mxu0 %v578
    %606 = vmatprep.subr.mxu0 0.0
    %607 = vmatpush1.msra.mxu0 %v579
    %608 = vmatprep.subr.mxu0 0.0
    %609 = vmatpush1.msra.mxu0 %v580
    %610 = vmatprep.subr.mxu0 0.0
    %611 = vmatpush1.msra.mxu0 %v581
    %612 = vmatprep.subr.mxu0 0.0
    %613 = vmatpush1.msra.mxu0 %v582
    %614 = vmatprep.subr.mxu0 0.0
    %615 = vmatpush1.msra.mxu0 %v583
    %616 = vmatprep.subr.mxu0 0.0
    %617 = vmatpush1.msra.mxu0 %v584
    %618 = vmatprep.subr.mxu0 0.0
    %619 = vmatpush1.msra.mxu0 %v585
    %620 = vmatprep.subr.mxu0 0.0
    %621 = vmatpush1.msra.mxu0 %v586
    %622 = vmatprep.subr.mxu0 0.0
    %623 = vmatpush1.msra.mxu0 %v587
    %624 = vmatprep.subr.mxu0 0.0
    %625 = vmatpush1.msra.mxu0 %v588
    %626 = vmatprep.subr.mxu0 0.0
    %627 = vmatpush1.msra.mxu0 %v589
    %628 = vmatprep.subr.mxu0 0.0
    %629 = vmatpush1.msra.mxu0 %v590
    %630 = vmatprep.subr.mxu0 0.0
    %631 = vmatpush1.msra.mxu0 0.0
    %632 = vmatprep.subr.mxu0 0.0
    %633 = vmatpush1.msra.mxu0 0.0
    %634 = vmatprep.subr.mxu0 0.0
    %635 = vmatpush1.msra.mxu0 0.0
    %636 = vmatprep.subr.mxu0 0.0
    %637 = vmatpush1.msra.mxu0 0.0
    %638 = vmatprep.subr.mxu0 0.0
    %639 = vmatpush1.msra.mxu0 0.0
    %640 = vmatprep.subr.mxu0 0.0
    %641 = vmatpush1.msra.mxu0 0.0
    %642 = vmatprep.subr.mxu0 0.0
    %643 = vmatpush1.msra.mxu0 0.0
    %644 = vmatprep.subr.mxu0 0.0
    %645 = vmatpush1.msra.mxu0 0.0
    %646 = vmatprep.subr.mxu0 0.0
    %647 = vmatpush1.msra.mxu0 0.0
    %648 = vmatprep.subr.mxu0 0.0
    %649 = vmatpush1.msra.mxu0 0.0
    %650 = vmatprep.subr.mxu0 0.0
    %651 = vmatpush1.msra.mxu0 0.0
    %652 = vmatprep.subr.mxu0 0.0
    %653 = vmatpush1.msra.mxu0 0.0
    %654 = vmatprep.subr.mxu0 0.0
    %655 = vmatpush1.msra.mxu0 0.0
    %656 = vmatprep.subr.mxu0 0.0
    %657 = vmatpush1.msra.mxu0 0.0
    %658 = vmatprep.subr.mxu0 0.0
    %659 = vmatpush1.msra.mxu0 0.0
    %660 = vmatprep.subr.mxu0 0.0
    %661 = vmatpush1.msra.mxu0 0.0
    %662 = vmatprep.mubr.f32.mxu0 0.0
    %663 = vmatmul.mubr.f32.gmra.mrb[0].mxu0 %v569
    %v664 = vpop.f32.mrb[0].mxu0
    %v665 = vadd.f32 %v596, %v664
    %v666 = vpop.f32.mrb[0].mxu0
    %667 = vmatprep.mubr.f32.mxu0 0.0
    %668 = vmatmul.mubr.f32.gmra.mrb[0].mxu0 %v570
    %v669 = vpop.f32.mrb[0].mxu0
    %v670 = vadd.f32 %v596, %v669
    %v671 = vpop.f32.mrb[0].mxu0
    %672 = vmatprep.mubr.f32.mxu0 0.0
    %673 = vmatmul.mubr.f32.gmra.mrb[0].mxu0 %v571
    %v674 = vpop.f32.mrb[0].mxu0
    %v675 = vadd.f32 %v596, %v674
    %v676 = vpop.f32.mrb[0].mxu0
    %677 = vmatprep.mubr.f32.mxu0 0.0
    %678 = vmatmul.mubr.f32.gmra.mrb[0].mxu0 %v572
    %v679 = vpop.f32.mrb[0].mxu0
    %v680 = vadd.f32 %v596, %v679
    %v681 = vpop.f32.mrb[0].mxu0
    %682 = vmatprep.mubr.f32.mxu0 0.0
    %683 = vmatmul.mubr.f32.gmra.mrb[0].mxu0 %v573
    %v684 = vpop.f32.mrb[0].mxu0
    %v685 = vadd.f32 %v596, %v684
    %v686 = vpop.f32.mrb[0].mxu0
    %687 = vmatprep.mubr.f32.mxu0 0.0
    %688 = vmatmul.mubr.f32.gmra.mrb[0].mxu0 %v574
    %v689 = vpop.f32.mrb[0].mxu0
    %v690 = vadd.f32 %v596, %v689
    %v691 = vpop.f32.mrb[0].mxu0
    %692 = vdwg.mxu0
    %v693 = vld [vmem:[#allocation2 + $0x1] sm:$0xff]
    %v694 = vld [vmem:[#allocation2 + $0x9] sm:$0xff]
    %v695 = vld [vmem:[#allocation2 + $0x11] sm:$0xff]
    %v696 = vld [vmem:[#allocation2 + $0x19] sm:$0xff]
    %v697 = vld [vmem:[#allocation2 + $0x21] sm:$0xff]
    %v698 = vld [vmem:[#allocation2 + $0x29] sm:$0xf]
    %s699 = scalar_lea.vmem %s3, 128
    %v700 = vld [vmem:[%s699] sm:$0xff]
    %v701 = vld [vmem:[%s699 + $0x8] sm:$0xff]
    %v702 = vld [vmem:[%s699 + $0x10] sm:$0xff]
    %v703 = vld [vmem:[%s699 + $0x18] sm:$0xff]
    %v704 = vld [vmem:[%s699 + $0x20] sm:$0xff]
    %v705 = vld [vmem:[%s699 + $0x28] sm:$0xff]
    %v706 = vld [vmem:[%s699 + $0x30] sm:$0xff]
    %v707 = vld [vmem:[%s699 + $0x38] sm:$0xff]
    %v708 = vld [vmem:[%s699 + $0x40] sm:$0xff]
    %v709 = vld [vmem:[%s699 + $0x48] sm:$0xff]
    %v710 = vld [vmem:[%s699 + $0x50] sm:$0xff]
    %v711 = vld [vmem:[%s699 + $0x58] sm:$0xff]
    %v712 = vld [vmem:[%s699 + $0x60] sm:$0xff]
    %v713 = vld [vmem:[%s699 + $0x68] sm:$0xff]
    %v714 = vld [vmem:[%s699 + $0x70] sm:$0xff]
    %v715 = vld [vmem:[%s699 + $0x78] sm:$0xff]
    %716 = vmatprep.subr.mxu0 0.0
    %717 = vmatpush1.msra.mxu0 %v700
    %718 = vmatprep.subr.mxu0 0.0
    %719 = vmatpush1.msra.mxu0 %v701
    %720 = vmatprep.subr.mxu0 0.0
    %721 = vmatpush1.msra.mxu0 %v702
    %722 = vmatprep.subr.mxu0 0.0
    %723 = vmatpush1.msra.mxu0 %v703
    %724 = vmatprep.subr.mxu0 0.0
    %725 = vmatpush1.msra.mxu0 %v704
    %726 = vmatprep.subr.mxu0 0.0
    %727 = vmatpush1.msra.mxu0 %v705
    %728 = vmatprep.subr.mxu0 0.0
    %729 = vmatpush1.msra.mxu0 %v706
    %730 = vmatprep.subr.mxu0 0.0
    %731 = vmatpush1.msra.mxu0 %v707
    %732 = vmatprep.subr.mxu0 0.0
    %733 = vmatpush1.msra.mxu0 %v708
    %734 = vmatprep.subr.mxu0 0.0
    %735 = vmatpush1.msra.mxu0 %v709
    %736 = vmatprep.subr.mxu0 0.0
    %737 = vmatpush1.msra.mxu0 %v710
    %738 = vmatprep.subr.mxu0 0.0
    %739 = vmatpush1.msra.mxu0 %v711
    %740 = vmatprep.subr.mxu0 0.0
    %741 = vmatpush1.msra.mxu0 %v712
    %742 = vmatprep.subr.mxu0 0.0
    %743 = vmatpush1.msra.mxu0 %v713
    %744 = vmatprep.subr.mxu0 0.0
    %745 = vmatpush1.msra.mxu0 %v714
    %746 = vmatprep.subr.mxu0 0.0
    %747 = vmatpush1.msra.mxu0 %v715
    %748 = vmatprep.subr.mxu0 0.0
    %749 = vmatpush1.msra.mxu0 0.0
    %750 = vmatprep.subr.mxu0 0.0
    %751 = vmatpush1.msra.mxu0 0.0
    %752 = vmatprep.subr.mxu0 0.0
    %753 = vmatpush1.msra.mxu0 0.0
    %754 = vmatprep.subr.mxu0 0.0
    %755 = vmatpush1.msra.mxu0 0.0
    %756 = vmatprep.subr.mxu0 0.0
    %757 = vmatpush1.msra.mxu0 0.0
    %758 = vmatprep.subr.mxu0 0.0
    %759 = vmatpush1.msra.mxu0 0.0
    %760 = vmatprep.subr.mxu0 0.0
    %761 = vmatpush1.msra.mxu0 0.0
    %762 = vmatprep.subr.mxu0 0.0
    %763 = vmatpush1.msra.mxu0 0.0
    %764 = vmatprep.subr.mxu0 0.0
    %765 = vmatpush1.msra.mxu0 0.0
    %766 = vmatprep.subr.mxu0 0.0
    %767 = vmatpush1.msra.mxu0 0.0
    %768 = vmatprep.subr.mxu0 0.0
    %769 = vmatpush1.msra.mxu0 0.0
    %770 = vmatprep.subr.mxu0 0.0
    %771 = vmatpush1.msra.mxu0 0.0
    %772 = vmatprep.subr.mxu0 0.0
    %773 = vmatpush1.msra.mxu0 0.0
    %774 = vmatprep.subr.mxu0 0.0
    %775 = vmatpush1.msra.mxu0 0.0
    %776 = vmatprep.subr.mxu0 0.0
    %777 = vmatpush1.msra.mxu0 0.0
    %778 = vmatprep.subr.mxu0 0.0
    %779 = vmatpush1.msra.mxu0 0.0
    %780 = vmatprep.mubr.f32.mxu0 0.0
    %781 = vmatmul.mubr.f32.gmra.mrb[0].mxu0 %v693
    %v782 = vpop.f32.mrb[0].mxu0
    %v783 = vadd.f32 0.0, %v782
    %v784 = vpop.f32.mrb[0].mxu0
    %785 = vmatprep.mubr.f32.mxu0 0.0
    %786 = vmatmul.mubr.f32.gmra.mrb[0].mxu0 %v694
    %v787 = vpop.f32.mrb[0].mxu0
    %v788 = vadd.f32 0.0, %v787
    %v789 = vpop.f32.mrb[0].mxu0
    %790 = vmatprep.mubr.f32.mxu0 0.0
    %791 = vmatmul.mubr.f32.gmra.mrb[0].mxu0 %v695
    %v792 = vpop.f32.mrb[0].mxu0
    %v793 = vadd.f32 0.0, %v792
    %v794 = vpop.f32.mrb[0].mxu0
    %795 = vmatprep.mubr.f32.mxu0 0.0
    %796 = vmatmul.mubr.f32.gmra.mrb[0].mxu0 %v696
    %v797 = vpop.f32.mrb[0].mxu0
    %v798 = vadd.f32 0.0, %v797
    %v799 = vpop.f32.mrb[0].mxu0
    %800 = vmatprep.mubr.f32.mxu0 0.0
    %801 = vmatmul.mubr.f32.gmra.mrb[0].mxu0 %v697
    %v802 = vpop.f32.mrb[0].mxu0
    %v803 = vadd.f32 0.0, %v802
    %v804 = vpop.f32.mrb[0].mxu0
    %805 = vmatprep.mubr.f32.mxu0 0.0
    %806 = vmatmul.mubr.f32.gmra.mrb[0].mxu0 %v698
    %v807 = vpop.f32.mrb[0].mxu0
    %v808 = vadd.f32 0.0, %v807
    %v809 = vpop.f32.mrb[0].mxu0
    %810 = vdwg.mxu0
    %v811 = vadd.f32 %v665, %v783
    %v812 = vadd.f32 %v670, %v788
    %v813 = vadd.f32 %v675, %v793
    %v814 = vadd.f32 %v680, %v798
    %v815 = vadd.f32 %v685, %v803
    %v816 = vadd.f32 %v690, %v808
    %v817 = vld [vmem:[#allocation2 + $0x5] sm:$0xff]
    %v818 = vld [vmem:[#allocation2 + $0xd] sm:$0xff]
    %v819 = vld [vmem:[#allocation2 + $0x15] sm:$0xff]
    %v820 = vld [vmem:[#allocation2 + $0x1d] sm:$0xff]
    %v821 = vld [vmem:[#allocation2 + $0x25] sm:$0xff]
    %v822 = vld [vmem:[#allocation2 + $0x2d] sm:$0xf]
    %s823 = scalar_lea.vmem %s3, 256
    %v824 = vld [vmem:[%s823] sm:$0xff]
    %v825 = vld [vmem:[%s823 + $0x8] sm:$0xff]
    %v826 = vld [vmem:[%s823 + $0x10] sm:$0xff]
    %v827 = vld [vmem:[%s823 + $0x18] sm:$0xff]
    %v828 = vld [vmem:[%s823 + $0x20] sm:$0xff]
    %v829 = vld [vmem:[%s823 + $0x28] sm:$0xff]
    %v830 = vld [vmem:[%s823 + $0x30] sm:$0xff]
    %v831 = vld [vmem:[%s823 + $0x38] sm:$0xff]
    %v832 = vld [vmem:[%s823 + $0x40] sm:$0xff]
    %v833 = vld [vmem:[%s823 + $0x48] sm:$0xff]
    %v834 = vld [vmem:[%s823 + $0x50] sm:$0xff]
    %v835 = vld [vmem:[%s823 + $0x58] sm:$0xff]
    %v836 = vld [vmem:[%s823 + $0x60] sm:$0xff]
    %v837 = vld [vmem:[%s823 + $0x68] sm:$0xff]
    %v838 = vld [vmem:[%s823 + $0x70] sm:$0xff]
    %v839 = vld [vmem:[%s823 + $0x78] sm:$0xff]
    %840 = vmatprep.subr.mxu0 0.0
    %841 = vmatpush1.msra.mxu0 %v824
    %842 = vmatprep.subr.mxu0 0.0
    %843 = vmatpush1.msra.mxu0 %v825
    %844 = vmatprep.subr.mxu0 0.0
    %845 = vmatpush1.msra.mxu0 %v826
    %846 = vmatprep.subr.mxu0 0.0
    %847 = vmatpush1.msra.mxu0 %v827
    %848 = vmatprep.subr.mxu0 0.0
    %849 = vmatpush1.msra.mxu0 %v828
    %850 = vmatprep.subr.mxu0 0.0
    %851 = vmatpush1.msra.mxu0 %v829
    %852 = vmatprep.subr.mxu0 0.0
    %853 = vmatpush1.msra.mxu0 %v830
    %854 = vmatprep.subr.mxu0 0.0
    %855 = vmatpush1.msra.mxu0 %v831
    %856 = vmatprep.subr.mxu0 0.0
    %857 = vmatpush1.msra.mxu0 %v832
    %858 = vmatprep.subr.mxu0 0.0
    %859 = vmatpush1.msra.mxu0 %v833
    %860 = vmatprep.subr.mxu0 0.0
    %861 = vmatpush1.msra.mxu0 %v834
    %862 = vmatprep.subr.mxu0 0.0
    %863 = vmatpush1.msra.mxu0 %v835
    %864 = vmatprep.subr.mxu0 0.0
    %865 = vmatpush1.msra.mxu0 %v836
    %866 = vmatprep.subr.mxu0 0.0
    %867 = vmatpush1.msra.mxu0 %v837
    %868 = vmatprep.subr.mxu0 0.0
    %869 = vmatpush1.msra.mxu0 %v838
    %870 = vmatprep.subr.mxu0 0.0
    %871 = vmatpush1.msra.mxu0 %v839
    %872 = vmatprep.subr.mxu0 0.0
    %873 = vmatpush1.msra.mxu0 0.0
    %874 = vmatprep.subr.mxu0 0.0
    %875 = vmatpush1.msra.mxu0 0.0
    %876 = vmatprep.subr.mxu0 0.0
    %877 = vmatpush1.msra.mxu0 0.0
    %878 = vmatprep.subr.mxu0 0.0
    %879 = vmatpush1.msra.mxu0 0.0
    %880 = vmatprep.subr.mxu0 0.0
    %881 = vmatpush1.msra.mxu0 0.0
    %882 = vmatprep.subr.mxu0 0.0
    %883 = vmatpush1.msra.mxu0 0.0
    %884 = vmatprep.subr.mxu0 0.0
    %885 = vmatpush1.msra.mxu0 0.0
    %886 = vmatprep.subr.mxu0 0.0
    %887 = vmatpush1.msra.mxu0 0.0
    %888 = vmatprep.subr.mxu0 0.0
    %889 = vmatpush1.msra.mxu0 0.0
    %890 = vmatprep.subr.mxu0 0.0
    %891 = vmatpush1.msra.mxu0 0.0
    %892 = vmatprep.subr.mxu0 0.0
    %893 = vmatpush1.msra.mxu0 0.0
    %894 = vmatprep.subr.mxu0 0.0
    %895 = vmatpush1.msra.mxu0 0.0
    %896 = vmatprep.subr.mxu0 0.0
    %897 = vmatpush1.msra.mxu0 0.0
    %898 = vmatprep.subr.mxu0 0.0
    %899 = vmatpush1.msra.mxu0 0.0
    %900 = vmatprep.subr.mxu0 0.0
    %901 = vmatpush1.msra.mxu0 0.0
    %902 = vmatprep.subr.mxu0 0.0
    %903 = vmatpush1.msra.mxu0 0.0
    %904 = vmatprep.mubr.f32.mxu0 0.0
    %905 = vmatmul.mubr.f32.gmra.mrb[0].mxu0 %v817
    %v906 = vpop.f32.mrb[0].mxu0
    %v907 = vadd.f32 0.0, %v906
    %v908 = vpop.f32.mrb[0].mxu0
    %909 = vmatprep.mubr.f32.mxu0 0.0
    %910 = vmatmul.mubr.f32.gmra.mrb[0].mxu0 %v818
    %v911 = vpop.f32.mrb[0].mxu0
    %v912 = vadd.f32 0.0, %v911
    %v913 = vpop.f32.mrb[0].mxu0
    %914 = vmatprep.mubr.f32.mxu0 0.0
    %915 = vmatmul.mubr.f32.gmra.mrb[0].mxu0 %v819
    %v916 = vpop.f32.mrb[0].mxu0
    %v917 = vadd.f32 0.0, %v916
    %v918 = vpop.f32.mrb[0].mxu0
    %919 = vmatprep.mubr.f32.mxu0 0.0
    %920 = vmatmul.mubr.f32.gmra.mrb[0].mxu0 %v820
    %v921 = vpop.f32.mrb[0].mxu0
    %v922 = vadd.f32 0.0, %v921
    %v923 = vpop.f32.mrb[0].mxu0
    %924 = vmatprep.mubr.f32.mxu0 0.0
    %925 = vmatmul.mubr.f32.gmra.mrb[0].mxu0 %v821
    %v926 = vpop.f32.mrb[0].mxu0
    %v927 = vadd.f32 0.0, %v926
    %v928 = vpop.f32.mrb[0].mxu0
    %929 = vmatprep.mubr.f32.mxu0 0.0
    %930 = vmatmul.mubr.f32.gmra.mrb[0].mxu0 %v822
    %v931 = vpop.f32.mrb[0].mxu0
    %v932 = vadd.f32 0.0, %v931
    %v933 = vpop.f32.mrb[0].mxu0
    %934 = vdwg.mxu0
    %v935 = vadd.f32 %v811, %v907
    %v936 = vadd.f32 %v812, %v912
    %v937 = vadd.f32 %v813, %v917
    %v938 = vadd.f32 %v814, %v922
    %v939 = vadd.f32 %v815, %v927
    %v940 = vadd.f32 %v816, %v932
    %v941 = vld [vmem:[#allocation2 + $0x6] sm:$0xff]
    %v942 = vld [vmem:[#allocation2 + $0xe] sm:$0xff]
    %v943 = vld [vmem:[#allocation2 + $0x16] sm:$0xff]
    %v944 = vld [vmem:[#allocation2 + $0x1e] sm:$0xff]
    %v945 = vld [vmem:[#allocation2 + $0x26] sm:$0xff]
    %v946 = vld [vmem:[#allocation2 + $0x2e] sm:$0xf]
    %s947 = scalar_lea.vmem %s3, 384
    %v948 = vld [vmem:[%s947] sm:$0xff]
    %v949 = vld [vmem:[%s947 + $0x8] sm:$0xff]
    %v950 = vld [vmem:[%s947 + $0x10] sm:$0xff]
    %v951 = vld [vmem:[%s947 + $0x18] sm:$0xff]
    %v952 = vld [vmem:[%s947 + $0x20] sm:$0xff]
    %v953 = vld [vmem:[%s947 + $0x28] sm:$0xff]
    %v954 = vld [vmem:[%s947 + $0x30] sm:$0xff]
    %v955 = vld [vmem:[%s947 + $0x38] sm:$0xff]
    %v956 = vld [vmem:[%s947 + $0x40] sm:$0xff]
    %v957 = vld [vmem:[%s947 + $0x48] sm:$0xff]
    %v958 = vld [vmem:[%s947 + $0x50] sm:$0xff]
    %v959 = vld [vmem:[%s947 + $0x58] sm:$0xff]
    %v960 = vld [vmem:[%s947 + $0x60] sm:$0xff]
    %v961 = vld [vmem:[%s947 + $0x68] sm:$0xff]
    %v962 = vld [vmem:[%s947 + $0x70] sm:$0xff]
    %v963 = vld [vmem:[%s947 + $0x78] sm:$0xff]
    %964 = vmatprep.subr.mxu0 0.0
    %965 = vmatpush1.msra.mxu0 %v948
    %966 = vmatprep.subr.mxu0 0.0
    %967 = vmatpush1.msra.mxu0 %v949
    %968 = vmatprep.subr.mxu0 0.0
    %969 = vmatpush1.msra.mxu0 %v950
    %970 = vmatprep.subr.mxu0 0.0
    %971 = vmatpush1.msra.mxu0 %v951
    %972 = vmatprep.subr.mxu0 0.0
    %973 = vmatpush1.msra.mxu0 %v952
    %974 = vmatprep.subr.mxu0 0.0
    %975 = vmatpush1.msra.mxu0 %v953
    %976 = vmatprep.subr.mxu0 0.0
    %977 = vmatpush1.msra.mxu0 %v954
    %978 = vmatprep.subr.mxu0 0.0
    %979 = vmatpush1.msra.mxu0 %v955
    %980 = vmatprep.subr.mxu0 0.0
    %981 = vmatpush1.msra.mxu0 %v956
    %982 = vmatprep.subr.mxu0 0.0
    %983 = vmatpush1.msra.mxu0 %v957
    %984 = vmatprep.subr.mxu0 0.0
    %985 = vmatpush1.msra.mxu0 %v958
    %986 = vmatprep.subr.mxu0 0.0
    %987 = vmatpush1.msra.mxu0 %v959
    %988 = vmatprep.subr.mxu0 0.0
    %989 = vmatpush1.msra.mxu0 %v960
    %990 = vmatprep.subr.mxu0 0.0
    %991 = vmatpush1.msra.mxu0 %v961
    %992 = vmatprep.subr.mxu0 0.0
    %993 = vmatpush1.msra.mxu0 %v962
    %994 = vmatprep.subr.mxu0 0.0
    %995 = vmatpush1.msra.mxu0 %v963
    %996 = vmatprep.subr.mxu0 0.0
    %997 = vmatpush1.msra.mxu0 0.0
    %998 = vmatprep.subr.mxu0 0.0
    %999 = vmatpush1.msra.mxu0 0.0
    %1000 = vmatprep.subr.mxu0 0.0
    %1001 = vmatpush1.msra.mxu0 0.0
    %1002 = vmatprep.subr.mxu0 0.0
    %1003 = vmatpush1.msra.mxu0 0.0
    %1004 = vmatprep.subr.mxu0 0.0
    %1005 = vmatpush1.msra.mxu0 0.0
    %1006 = vmatprep.subr.mxu0 0.0
    %1007 = vmatpush1.msra.mxu0 0.0
    %1008 = vmatprep.subr.mxu0 0.0
    %1009 = vmatpush1.msra.mxu0 0.0
    %1010 = vmatprep.subr.mxu0 0.0
    %1011 = vmatpush1.msra.mxu0 0.0
    %1012 = vmatprep.subr.mxu0 0.0
    %1013 = vmatpush1.msra.mxu0 0.0
    %1014 = vmatprep.subr.mxu0 0.0
    %1015 = vmatpush1.msra.mxu0 0.0
    %1016 = vmatprep.subr.mxu0 0.0
    %1017 = vmatpush1.msra.mxu0 0.0
    %1018 = vmatprep.subr.mxu0 0.0
    %1019 = vmatpush1.msra.mxu0 0.0
    %1020 = vmatprep.subr.mxu0 0.0
    %1021 = vmatpush1.msra.mxu0 0.0
    %1022 = vmatprep.subr.mxu0 0.0
    %1023 = vmatpush1.msra.mxu0 0.0
    %1024 = vmatprep.subr.mxu0 0.0
    %1025 = vmatpush1.msra.mxu0 0.0
    %1026 = vmatprep.subr.mxu0 0.0
    %1027 = vmatpush1.msra.mxu0 0.0
    %1028 = vmatprep.mubr.f32.mxu0 0.0
    %1029 = vmatmul.mubr.f32.gmra.mrb[0].mxu0 %v941
    %v1030 = vpop.f32.mrb[0].mxu0
    %v1031 = vadd.f32 0.0, %v1030
    %v1032 = vpop.f32.mrb[0].mxu0
    %1033 = vmatprep.mubr.f32.mxu0 0.0
    %1034 = vmatmul.mubr.f32.gmra.mrb[0].mxu0 %v942
    %v1035 = vpop.f32.mrb[0].mxu0
    %v1036 = vadd.f32 0.0, %v1035
    %v1037 = vpop.f32.mrb[0].mxu0
    %1038 = vmatprep.mubr.f32.mxu0 0.0
    %1039 = vmatmul.mubr.f32.gmra.mrb[0].mxu0 %v943
    %v1040 = vpop.f32.mrb[0].mxu0
    %v1041 = vadd.f32 0.0, %v1040
    %v1042 = vpop.f32.mrb[0].mxu0
    %1043 = vmatprep.mubr.f32.mxu0 0.0
    %1044 = vmatmul.mubr.f32.gmra.mrb[0].mxu0 %v944
    %v1045 = vpop.f32.mrb[0].mxu0
    %v1046 = vadd.f32 0.0, %v1045
    %v1047 = vpop.f32.mrb[0].mxu0
    %1048 = vmatprep.mubr.f32.mxu0 0.0
    %1049 = vmatmul.mubr.f32.gmra.mrb[0].mxu0 %v945
    %v1050 = vpop.f32.mrb[0].mxu0
    %v1051 = vadd.f32 0.0, %v1050
    %v1052 = vpop.f32.mrb[0].mxu0
    %1053 = vmatprep.mubr.f32.mxu0 0.0
    %1054 = vmatmul.mubr.f32.gmra.mrb[0].mxu0 %v946
    %v1055 = vpop.f32.mrb[0].mxu0
    %v1056 = vadd.f32 0.0, %v1055
    %v1057 = vpop.f32.mrb[0].mxu0
    %1058 = vdwg.mxu0
    %v1059 = vadd.f32 %v935, %v1031
    %v1060 = vadd.f32 %v936, %v1036
    %v1061 = vadd.f32 %v937, %v1041
    %v1062 = vadd.f32 %v938, %v1046
    %v1063 = vadd.f32 %v939, %v1051
    %v1064 = vadd.f32 %v940, %v1056
    %v1065 = vmax.f32 %v1059, 0.0
    %v1066 = vmax.f32 %v1060, 0.0
    %v1067 = vmax.f32 %v1061, 0.0
    %v1068 = vmax.f32 %v1062, 0.0
    %v1069 = vmax.f32 %v1063, 0.0
    %v1070 = vmax.f32 %v1064, 0.0
    %v1071 = vld [vmem:[%s5] sm:$0xff]
    %v1072 = vld [vmem:[%s5 + $0x8] sm:$0xff]
    %v1073 = vld [vmem:[%s5 + $0x10] sm:$0xff]
    %v1074 = vld [vmem:[%s5 + $0x18] sm:$0xff]
    %v1075 = vld [vmem:[%s5 + $0x20] sm:$0xff]
    %v1076 = vld [vmem:[%s5 + $0x28] sm:$0xff]
    %v1077 = vld [vmem:[%s5 + $0x30] sm:$0xff]
    %v1078 = vld [vmem:[%s5 + $0x38] sm:$0xff]
    %v1079 = vld [vmem:[%s6] sm:$0x1]
    %v1081 = vlaneseq
    %v1082 = vshrl.u32 %v1081, 7
    %v1083 = vsub.s32 0, %v1082
    %v1084 = vrot.slane %v1079, %v1083
    %v1087 = vsel %vm372, %v1065, 0
    %v1090 = vsel %vm372, %v1066, 0
    %v1093 = vsel %vm372, %v1067, 0
    %v1096 = vsel %vm372, %v1068, 0
    %1098 = vmatprep.subr.mxu0 0.0
    %1099 = vmatpush1.msra.mxu0 %v1071
    %1100 = vmatprep.subr.mxu0 0.0
    %1101 = vmatpush1.msra.mxu0 %v1072
    %1102 = vmatprep.subr.mxu0 0.0
    %1103 = vmatpush1.msra.mxu0 %v1073
    %1104 = vmatprep.subr.mxu0 0.0
    %1105 = vmatpush1.msra.mxu0 %v1074
    %1106 = vmatprep.subr.mxu0 0.0
    %1107 = vmatpush1.msra.mxu0 %v1075
    %1108 = vmatprep.subr.mxu0 0.0
    %1109 = vmatpush1.msra.mxu0 %v1076
    %1110 = vmatprep.subr.mxu0 0.0
    %1111 = vmatpush1.msra.mxu0 %v1077
    %1112 = vmatprep.subr.mxu0 0.0
    %1113 = vmatpush1.msra.mxu0 %v1078
    %1114 = vmatprep.subr.mxu0 0.0
    %1115 = vmatpush1.msra.mxu0 0.0
    %1116 = vmatprep.subr.mxu0 0.0
    %1117 = vmatpush1.msra.mxu0 0.0
    %1118 = vmatprep.subr.mxu0 0.0
    %1119 = vmatpush1.msra.mxu0 0.0
    %1120 = vmatprep.subr.mxu0 0.0
    %1121 = vmatpush1.msra.mxu0 0.0
    %1122 = vmatprep.subr.mxu0 0.0
    %1123 = vmatpush1.msra.mxu0 0.0
    %1124 = vmatprep.subr.mxu0 0.0
    %1125 = vmatpush1.msra.mxu0 0.0
    %1126 = vmatprep.subr.mxu0 0.0
    %1127 = vmatpush1.msra.mxu0 0.0
    %1128 = vmatprep.subr.mxu0 0.0
    %1129 = vmatpush1.msra.mxu0 0.0
    %1130 = vmatprep.subr.mxu0 0.0
    %1131 = vmatpush1.msra.mxu0 0.0
    %1132 = vmatprep.subr.mxu0 0.0
    %1133 = vmatpush1.msra.mxu0 0.0
    %1134 = vmatprep.subr.mxu0 0.0
    %1135 = vmatpush1.msra.mxu0 0.0
    %1136 = vmatprep.subr.mxu0 0.0
    %1137 = vmatpush1.msra.mxu0 0.0
    %1138 = vmatprep.subr.mxu0 0.0
    %1139 = vmatpush1.msra.mxu0 0.0
    %1140 = vmatprep.subr.mxu0 0.0
    %1141 = vmatpush1.msra.mxu0 0.0
    %1142 = vmatprep.subr.mxu0 0.0
    %1143 = vmatpush1.msra.mxu0 0.0
    %1144 = vmatprep.subr.mxu0 0.0
    %1145 = vmatpush1.msra.mxu0 0.0
    %1146 = vmatprep.subr.mxu0 0.0
    %1147 = vmatpush1.msra.mxu0 0.0
    %1148 = vmatprep.subr.mxu0 0.0
    %1149 = vmatpush1.msra.mxu0 0.0
    %1150 = vmatprep.subr.mxu0 0.0
    %1151 = vmatpush1.msra.mxu0 0.0
    %1152 = vmatprep.subr.mxu0 0.0
    %1153 = vmatpush1.msra.mxu0 0.0
    %1154 = vmatprep.subr.mxu0 0.0
    %1155 = vmatpush1.msra.mxu0 0.0
    %1156 = vmatprep.subr.mxu0 0.0
    %1157 = vmatpush1.msra.mxu0 0.0
    %1158 = vmatprep.subr.mxu0 0.0
    %1159 = vmatpush1.msra.mxu0 0.0
    %1160 = vmatprep.subr.mxu0 0.0
    %1161 = vmatpush1.msra.mxu0 0.0
    %1162 = vmatprep.mubr.f32.mxu0 0.0
    %1163 = vmatmul.mubr.f32.gmra.mrb[0].mxu0 %v1087
    %v1164 = vpop.f32.mrb[0].mxu0
    %v1165 = vadd.f32 %v1084, %v1164
    %v1166 = vpop.f32.mrb[0].mxu0
    %1167 = vmatprep.mubr.f32.mxu0 0.0
    %1168 = vmatmul.mubr.f32.gmra.mrb[0].mxu0 %v1090
    %v1169 = vpop.f32.mrb[0].mxu0
    %v1170 = vpop.f32.mrb[0].mxu0
    %1171 = vmatprep.mubr.f32.mxu0 0.0
    %1172 = vmatmul.mubr.f32.gmra.mrb[0].mxu0 %v1093
    %v1173 = vpop.f32.mrb[0].mxu0
    %v1174 = vpop.f32.mrb[0].mxu0
    %1175 = vmatprep.mubr.f32.mxu0 0.0
    %1176 = vmatmul.mubr.f32.gmra.mrb[0].mxu0 %v1096
    %v1177 = vpop.f32.mrb[0].mxu0
    %v1178 = vadd.f32 %v1084, %v1177
    %v1179 = vpop.f32.mrb[0].mxu0
    %1180 = vdwg.mxu0
    %s1181 = scalar_lea.vmem %s5, 64
    %v1182 = vld [vmem:[%s1181] sm:$0xff]
    %v1183 = vld [vmem:[%s1181 + $0x8] sm:$0xff]
    %v1184 = vld [vmem:[%s1181 + $0x10] sm:$0xff]
    %v1185 = vld [vmem:[%s1181 + $0x18] sm:$0xff]
    %v1186 = vld [vmem:[%s1181 + $0x20] sm:$0xff]
    %v1187 = vld [vmem:[%s1181 + $0x28] sm:$0xff]
    %v1188 = vld [vmem:[%s1181 + $0x30] sm:$0xff]
    %v1189 = vld [vmem:[%s1181 + $0x38] sm:$0xff]
    %vm1191 = vcmask 1046528
    %v1192 = vrot.slane %v1065, 1
    %v1193 = vrot.slane %v1066, 1
    %v1194 = vsel %vm1191, %v1192, %v1193
    %v1195 = vrot.slane %v1067, 1
    %v1196 = vsel %vm1191, %v1193, %v1195
    %v1197 = vrot.slane %v1068, 1
    %v1198 = vsel %vm1191, %v1195, %v1197
    %v1199 = vrot.slane %v1069, 1
    %v1200 = vsel %vm1191, %v1197, %v1199
    %v1201 = vsel %vm372, %v1194, 0
    %v1203 = vsel %vm372, %v1196, 0
    %v1205 = vsel %vm372, %v1198, 0
    %v1207 = vsel %vm372, %v1200, 0
    %1209 = vmatprep.subr.mxu0 0.0
    %1210 = vmatpush1.msra.mxu0 %v1182
    %1211 = vmatprep.subr.mxu0 0.0
    %1212 = vmatpush1.msra.mxu0 %v1183
    %1213 = vmatprep.subr.mxu0 0.0
    %1214 = vmatpush1.msra.mxu0 %v1184
    %1215 = vmatprep.subr.mxu0 0.0
    %1216 = vmatpush1.msra.mxu0 %v1185
    %1217 = vmatprep.subr.mxu0 0.0
    %1218 = vmatpush1.msra.mxu0 %v1186
    %1219 = vmatprep.subr.mxu0 0.0
    %1220 = vmatpush1.msra.mxu0 %v1187
    %1221 = vmatprep.subr.mxu0 0.0
    %1222 = vmatpush1.msra.mxu0 %v1188
    %1223 = vmatprep.subr.mxu0 0.0
    %1224 = vmatpush1.msra.mxu0 %v1189
    %1225 = vmatprep.subr.mxu0 0.0
    %1226 = vmatpush1.msra.mxu0 0.0
    %1227 = vmatprep.subr.mxu0 0.0
    %1228 = vmatpush1.msra.mxu0 0.0
    %1229 = vmatprep.subr.mxu0 0.0
    %1230 = vmatpush1.msra.mxu0 0.0
    %1231 = vmatprep.subr.mxu0 0.0
    %1232 = vmatpush1.msra.mxu0 0.0
    %1233 = vmatprep.subr.mxu0 0.0
    %1234 = vmatpush1.msra.mxu0 0.0
    %1235 = vmatprep.subr.mxu0 0.0
    %1236 = vmatpush1.msra.mxu0 0.0
    %1237 = vmatprep.subr.mxu0 0.0
    %1238 = vmatpush1.msra.mxu0 0.0
    %1239 = vmatprep.subr.mxu0 0.0
    %1240 = vmatpush1.msra.mxu0 0.0
    %1241 = vmatprep.subr.mxu0 0.0
    %1242 = vmatpush1.msra.mxu0 0.0
    %1243 = vmatprep.subr.mxu0 0.0
    %1244 = vmatpush1.msra.mxu0 0.0
    %1245 = vmatprep.subr.mxu0 0.0
    %1246 = vmatpush1.msra.mxu0 0.0
    %1247 = vmatprep.subr.mxu0 0.0
    %1248 = vmatpush1.msra.mxu0 0.0
    %1249 = vmatprep.subr.mxu0 0.0
    %1250 = vmatpush1.msra.mxu0 0.0
    %1251 = vmatprep.subr.mxu0 0.0
    %1252 = vmatpush1.msra.mxu0 0.0
    %1253 = vmatprep.subr.mxu0 0.0
    %1254 = vmatpush1.msra.mxu0 0.0
    %1255 = vmatprep.subr.mxu0 0.0
    %1256 = vmatpush1.msra.mxu0 0.0
    %1257 = vmatprep.subr.mxu0 0.0
    %1258 = vmatpush1.msra.mxu0 0.0
    %1259 = vmatprep.subr.mxu0 0.0
    %1260 = vmatpush1.msra.mxu0 0.0
    %1261 = vmatprep.subr.mxu0 0.0
    %1262 = vmatpush1.msra.mxu0 0.0
    %1263 = vmatprep.subr.mxu0 0.0
    %1264 = vmatpush1.msra.mxu0 0.0
    %1265 = vmatprep.subr.mxu0 0.0
    %1266 = vmatpush1.msra.mxu0 0.0
    %1267 = vmatprep.subr.mxu0 0.0
    %1268 = vmatpush1.msra.mxu0 0.0
    %1269 = vmatprep.subr.mxu0 0.0
    %1270 = vmatpush1.msra.mxu0 0.0
    %1271 = vmatprep.subr.mxu0 0.0
    %1272 = vmatpush1.msra.mxu0 0.0
    %1273 = vmatprep.mubr.f32.mxu0 0.0
    %1274 = vmatmul.mubr.f32.gmra.mrb[0].mxu0 %v1201
    %v1275 = vpop.f32.mrb[0].mxu0
    %v1276 = vadd.f32 0.0, %v1275
    %v1277 = vpop.f32.mrb[0].mxu0
    %1278 = vmatprep.mubr.f32.mxu0 0.0
    %1279 = vmatmul.mubr.f32.gmra.mrb[0].mxu0 %v1203
    %v1280 = vpop.f32.mrb[0].mxu0
    %v1281 = vpop.f32.mrb[0].mxu0
    %1282 = vmatprep.mubr.f32.mxu0 0.0
    %1283 = vmatmul.mubr.f32.gmra.mrb[0].mxu0 %v1205
    %v1284 = vpop.f32.mrb[0].mxu0
    %v1285 = vpop.f32.mrb[0].mxu0
    %1286 = vmatprep.mubr.f32.mxu0 0.0
    %1287 = vmatmul.mubr.f32.gmra.mrb[0].mxu0 %v1207
    %v1288 = vpop.f32.mrb[0].mxu0
    %v1289 = vadd.f32 0.0, %v1288
    %v1290 = vpop.f32.mrb[0].mxu0
    %1291 = vdwg.mxu0
    %v1292 = vadd.f32 %v1165, %v1276
    %v1293 = vadd.f32 %v1178, %v1289
    %s1294 = scalar_lea.vmem %s5, 128
    %v1295 = vld [vmem:[%s1294] sm:$0xff]
    %v1296 = vld [vmem:[%s1294 + $0x8] sm:$0xff]
    %v1297 = vld [vmem:[%s1294 + $0x10] sm:$0xff]
    %v1298 = vld [vmem:[%s1294 + $0x18] sm:$0xff]
    %v1299 = vld [vmem:[%s1294 + $0x20] sm:$0xff]
    %v1300 = vld [vmem:[%s1294 + $0x28] sm:$0xff]
    %v1301 = vld [vmem:[%s1294 + $0x30] sm:$0xff]
    %v1302 = vld [vmem:[%s1294 + $0x38] sm:$0xff]
    %vm1303 = vcmask 1045504
    %v1304 = vrot.slane %v1065, 2
    %v1305 = vrot.slane %v1066, 2
    %v1306 = vsel %vm1303, %v1304, %v1305
    %v1307 = vrot.slane %v1067, 2
    %v1308 = vsel %vm1303, %v1305, %v1307
    %v1309 = vrot.slane %v1068, 2
    %v1310 = vsel %vm1303, %v1307, %v1309
    %v1311 = vrot.slane %v1069, 2
    %v1312 = vsel %vm1303, %v1309, %v1311
    %v1313 = vsel %vm372, %v1306, 0
    %v1315 = vsel %vm372, %v1308, 0
    %v1317 = vsel %vm372, %v1310, 0
    %v1319 = vsel %vm372, %v1312, 0
    %1321 = vmatprep.subr.mxu0 0.0
    %1322 = vmatpush1.msra.mxu0 %v1295
    %1323 = vmatprep.subr.mxu0 0.0
    %1324 = vmatpush1.msra.mxu0 %v1296
    %1325 = vmatprep.subr.mxu0 0.0
    %1326 = vmatpush1.msra.mxu0 %v1297
    %1327 = vmatprep.subr.mxu0 0.0
    %1328 = vmatpush1.msra.mxu0 %v1298
    %1329 = vmatprep.subr.mxu0 0.0
    %1330 = vmatpush1.msra.mxu0 %v1299
    %1331 = vmatprep.subr.mxu0 0.0
    %1332 = vmatpush1.msra.mxu0 %v1300
    %1333 = vmatprep.subr.mxu0 0.0
    %1334 = vmatpush1.msra.mxu0 %v1301
    %1335 = vmatprep.subr.mxu0 0.0
    %1336 = vmatpush1.msra.mxu0 %v1302
    %1337 = vmatprep.subr.mxu0 0.0
    %1338 = vmatpush1.msra.mxu0 0.0
    %1339 = vmatprep.subr.mxu0 0.0
    %1340 = vmatpush1.msra.mxu0 0.0
    %1341 = vmatprep.subr.mxu0 0.0
    %1342 = vmatpush1.msra.mxu0 0.0
    %1343 = vmatprep.subr.mxu0 0.0
    %1344 = vmatpush1.msra.mxu0 0.0
    %1345 = vmatprep.subr.mxu0 0.0
    %1346 = vmatpush1.msra.mxu0 0.0
    %1347 = vmatprep.subr.mxu0 0.0
    %1348 = vmatpush1.msra.mxu0 0.0
    %1349 = vmatprep.subr.mxu0 0.0
    %1350 = vmatpush1.msra.mxu0 0.0
    %1351 = vmatprep.subr.mxu0 0.0
    %1352 = vmatpush1.msra.mxu0 0.0
    %1353 = vmatprep.subr.mxu0 0.0
    %1354 = vmatpush1.msra.mxu0 0.0
    %1355 = vmatprep.subr.mxu0 0.0
    %1356 = vmatpush1.msra.mxu0 0.0
    %1357 = vmatprep.subr.mxu0 0.0
    %1358 = vmatpush1.msra.mxu0 0.0
    %1359 = vmatprep.subr.mxu0 0.0
    %1360 = vmatpush1.msra.mxu0 0.0
    %1361 = vmatprep.subr.mxu0 0.0
    %1362 = vmatpush1.msra.mxu0 0.0
    %1363 = vmatprep.subr.mxu0 0.0
    %1364 = vmatpush1.msra.mxu0 0.0
    %1365 = vmatprep.subr.mxu0 0.0
    %1366 = vmatpush1.msra.mxu0 0.0
    %1367 = vmatprep.subr.mxu0 0.0
    %1368 = vmatpush1.msra.mxu0 0.0
    %1369 = vmatprep.subr.mxu0 0.0
    %1370 = vmatpush1.msra.mxu0 0.0
    %1371 = vmatprep.subr.mxu0 0.0
    %1372 = vmatpush1.msra.mxu0 0.0
    %1373 = vmatprep.subr.mxu0 0.0
    %1374 = vmatpush1.msra.mxu0 0.0
    %1375 = vmatprep.subr.mxu0 0.0
    %1376 = vmatpush1.msra.mxu0 0.0
    %1377 = vmatprep.subr.mxu0 0.0
    %1378 = vmatpush1.msra.mxu0 0.0
    %1379 = vmatprep.subr.mxu0 0.0
    %1380 = vmatpush1.msra.mxu0 0.0
    %1381 = vmatprep.subr.mxu0 0.0
    %1382 = vmatpush1.msra.mxu0 0.0
    %1383 = vmatprep.subr.mxu0 0.0
    %1384 = vmatpush1.msra.mxu0 0.0
    %1385 = vmatprep.mubr.f32.mxu0 0.0
    %1386 = vmatmul.mubr.f32.gmra.mrb[0].mxu0 %v1313
    %v1387 = vpop.f32.mrb[0].mxu0
    %v1388 = vadd.f32 0.0, %v1387
    %v1389 = vpop.f32.mrb[0].mxu0
    %1390 = vmatprep.mubr.f32.mxu0 0.0
    %1391 = vmatmul.mubr.f32.gmra.mrb[0].mxu0 %v1315
    %v1392 = vpop.f32.mrb[0].mxu0
    %v1393 = vpop.f32.mrb[0].mxu0
    %1394 = vmatprep.mubr.f32.mxu0 0.0
    %1395 = vmatmul.mubr.f32.gmra.mrb[0].mxu0 %v1317
    %v1396 = vpop.f32.mrb[0].mxu0
    %v1397 = vpop.f32.mrb[0].mxu0
    %1398 = vmatprep.mubr.f32.mxu0 0.0
    %1399 = vmatmul.mubr.f32.gmra.mrb[0].mxu0 %v1319
    %v1400 = vpop.f32.mrb[0].mxu0
    %v1401 = vadd.f32 0.0, %v1400
    %v1402 = vpop.f32.mrb[0].mxu0
    %1403 = vdwg.mxu0
    %v1404 = vadd.f32 %v1292, %v1388
    %v1405 = vadd.f32 %v1293, %v1401
    %s1406 = scalar_lea.vmem %s5, 192
    %v1407 = vld [vmem:[%s1406] sm:$0xff]
    %v1408 = vld [vmem:[%s1406 + $0x8] sm:$0xff]
    %v1409 = vld [vmem:[%s1406 + $0x10] sm:$0xff]
    %v1410 = vld [vmem:[%s1406 + $0x18] sm:$0xff]
    %v1411 = vld [vmem:[%s1406 + $0x20] sm:$0xff]
    %v1412 = vld [vmem:[%s1406 + $0x28] sm:$0xff]
    %v1413 = vld [vmem:[%s1406 + $0x30] sm:$0xff]
    %v1414 = vld [vmem:[%s1406 + $0x38] sm:$0xff]
    %vm1415 = vcmask 1042432
    %v1416 = vrot.slane %v1065, 5
    %v1417 = vrot.slane %v1066, 5
    %v1418 = vsel %vm1415, %v1416, %v1417
    %v1419 = vrot.slane %v1067, 5
    %v1420 = vsel %vm1415, %v1417, %v1419
    %v1421 = vrot.slane %v1068, 5
    %v1422 = vsel %vm1415, %v1419, %v1421
    %v1423 = vrot.slane %v1069, 5
    %v1424 = vsel %vm1415, %v1421, %v1423
    %v1425 = vsel %vm372, %v1418, 0
    %v1427 = vsel %vm372, %v1420, 0
    %v1429 = vsel %vm372, %v1422, 0
    %v1431 = vsel %vm372, %v1424, 0
    %1433 = vmatprep.subr.mxu0 0.0
    %1434 = vmatpush1.msra.mxu0 %v1407
    %1435 = vmatprep.subr.mxu0 0.0
    %1436 = vmatpush1.msra.mxu0 %v1408
    %1437 = vmatprep.subr.mxu0 0.0
    %1438 = vmatpush1.msra.mxu0 %v1409
    %1439 = vmatprep.subr.mxu0 0.0
    %1440 = vmatpush1.msra.mxu0 %v1410
    %1441 = vmatprep.subr.mxu0 0.0
    %1442 = vmatpush1.msra.mxu0 %v1411
    %1443 = vmatprep.subr.mxu0 0.0
    %1444 = vmatpush1.msra.mxu0 %v1412
    %1445 = vmatprep.subr.mxu0 0.0
    %1446 = vmatpush1.msra.mxu0 %v1413
    %1447 = vmatprep.subr.mxu0 0.0
    %1448 = vmatpush1.msra.mxu0 %v1414
    %1449 = vmatprep.subr.mxu0 0.0
    %1450 = vmatpush1.msra.mxu0 0.0
    %1451 = vmatprep.subr.mxu0 0.0
    %1452 = vmatpush1.msra.mxu0 0.0
    %1453 = vmatprep.subr.mxu0 0.0
    %1454 = vmatpush1.msra.mxu0 0.0
    %1455 = vmatprep.subr.mxu0 0.0
    %1456 = vmatpush1.msra.mxu0 0.0
    %1457 = vmatprep.subr.mxu0 0.0
    %1458 = vmatpush1.msra.mxu0 0.0
    %1459 = vmatprep.subr.mxu0 0.0
    %1460 = vmatpush1.msra.mxu0 0.0
    %1461 = vmatprep.subr.mxu0 0.0
    %1462 = vmatpush1.msra.mxu0 0.0
    %1463 = vmatprep.subr.mxu0 0.0
    %1464 = vmatpush1.msra.mxu0 0.0
    %1465 = vmatprep.subr.mxu0 0.0
    %1466 = vmatpush1.msra.mxu0 0.0
    %1467 = vmatprep.subr.mxu0 0.0
    %1468 = vmatpush1.msra.mxu0 0.0
    %1469 = vmatprep.subr.mxu0 0.0
    %1470 = vmatpush1.msra.mxu0 0.0
    %1471 = vmatprep.subr.mxu0 0.0
    %1472 = vmatpush1.msra.mxu0 0.0
    %1473 = vmatprep.subr.mxu0 0.0
    %1474 = vmatpush1.msra.mxu0 0.0
    %1475 = vmatprep.subr.mxu0 0.0
    %1476 = vmatpush1.msra.mxu0 0.0
    %1477 = vmatprep.subr.mxu0 0.0
    %1478 = vmatpush1.msra.mxu0 0.0
    %1479 = vmatprep.subr.mxu0 0.0
    %1480 = vmatpush1.msra.mxu0 0.0
    %1481 = vmatprep.subr.mxu0 0.0
    %1482 = vmatpush1.msra.mxu0 0.0
    %1483 = vmatprep.subr.mxu0 0.0
    %1484 = vmatpush1.msra.mxu0 0.0
    %1485 = vmatprep.subr.mxu0 0.0
    %1486 = vmatpush1.msra.mxu0 0.0
    %1487 = vmatprep.subr.mxu0 0.0
    %1488 = vmatpush1.msra.mxu0 0.0
    %1489 = vmatprep.subr.mxu0 0.0
    %1490 = vmatpush1.msra.mxu0 0.0
    %1491 = vmatprep.subr.mxu0 0.0
    %1492 = vmatpush1.msra.mxu0 0.0
    %1493 = vmatprep.subr.mxu0 0.0
    %1494 = vmatpush1.msra.mxu0 0.0
    %1495 = vmatprep.subr.mxu0 0.0
    %1496 = vmatpush1.msra.mxu0 0.0
    %1497 = vmatprep.mubr.f32.mxu0 0.0
    %1498 = vmatmul.mubr.f32.gmra.mrb[0].mxu0 %v1425
    %v1499 = vpop.f32.mrb[0].mxu0
    %v1500 = vadd.f32 0.0, %v1499
    %v1501 = vpop.f32.mrb[0].mxu0
    %1502 = vmatprep.mubr.f32.mxu0 0.0
    %1503 = vmatmul.mubr.f32.gmra.mrb[0].mxu0 %v1427
    %v1504 = vpop.f32.mrb[0].mxu0
    %v1505 = vpop.f32.mrb[0].mxu0
    %1506 = vmatprep.mubr.f32.mxu0 0.0
    %1507 = vmatmul.mubr.f32.gmra.mrb[0].mxu0 %v1429
    %v1508 = vpop.f32.mrb[0].mxu0
    %v1509 = vpop.f32.mrb[0].mxu0
    %1510 = vmatprep.mubr.f32.mxu0 0.0
    %1511 = vmatmul.mubr.f32.gmra.mrb[0].mxu0 %v1431
    %v1512 = vpop.f32.mrb[0].mxu0
    %v1513 = vadd.f32 0.0, %v1512
    %v1514 = vpop.f32.mrb[0].mxu0
    %1515 = vdwg.mxu0
    %v1516 = vadd.f32 %v1404, %v1500
    %v1517 = vadd.f32 %v1405, %v1513
    %s1518 = scalar_lea.vmem %s5, 256
    %v1519 = vld [vmem:[%s1518] sm:$0xff]
    %v1520 = vld [vmem:[%s1518 + $0x8] sm:$0xff]
    %v1521 = vld [vmem:[%s1518 + $0x10] sm:$0xff]
    %v1522 = vld [vmem:[%s1518 + $0x18] sm:$0xff]
    %v1523 = vld [vmem:[%s1518 + $0x20] sm:$0xff]
    %v1524 = vld [vmem:[%s1518 + $0x28] sm:$0xff]
    %v1525 = vld [vmem:[%s1518 + $0x30] sm:$0xff]
    %v1526 = vld [vmem:[%s1518 + $0x38] sm:$0xff]
    %v1527 = vrot.slane %v1065, 6
    %v1528 = vrot.slane %v1066, 6
    %v1529 = vsel %vm394, %v1527, %v1528
    %v1530 = vrot.slane %v1067, 6
    %v1531 = vsel %vm394, %v1528, %v1530
    %v1532 = vrot.slane %v1068, 6
    %v1533 = vsel %vm394, %v1530, %v1532
    %v1534 = vrot.slane %v1069, 6
    %v1535 = vsel %vm394, %v1532, %v1534
    %v1536 = vsel %vm372, %v1529, 0
    %v1538 = vsel %vm372, %v1531, 0
    %v1540 = vsel %vm372, %v1533, 0
    %v1542 = vsel %vm372, %v1535, 0
    %1544 = vmatprep.subr.mxu0 0.0
    %1545 = vmatpush1.msra.mxu0 %v1519
    %1546 = vmatprep.subr.mxu0 0.0
    %1547 = vmatpush1.msra.mxu0 %v1520
    %1548 = vmatprep.subr.mxu0 0.0
    %1549 = vmatpush1.msra.mxu0 %v1521
    %1550 = vmatprep.subr.mxu0 0.0
    %1551 = vmatpush1.msra.mxu0 %v1522
    %1552 = vmatprep.subr.mxu0 0.0
    %1553 = vmatpush1.msra.mxu0 %v1523
    %1554 = vmatprep.subr.mxu0 0.0
    %1555 = vmatpush1.msra.mxu0 %v1524
    %1556 = vmatprep.subr.mxu0 0.0
    %1557 = vmatpush1.msra.mxu0 %v1525
    %1558 = vmatprep.subr.mxu0 0.0
    %1559 = vmatpush1.msra.mxu0 %v1526
    %1560 = vmatprep.subr.mxu0 0.0
    %1561 = vmatpush1.msra.mxu0 0.0
    %1562 = vmatprep.subr.mxu0 0.0
    %1563 = vmatpush1.msra.mxu0 0.0
    %1564 = vmatprep.subr.mxu0 0.0
    %1565 = vmatpush1.msra.mxu0 0.0
    %1566 = vmatprep.subr.mxu0 0.0
    %1567 = vmatpush1.msra.mxu0 0.0
    %1568 = vmatprep.subr.mxu0 0.0
    %1569 = vmatpush1.msra.mxu0 0.0
    %1570 = vmatprep.subr.mxu0 0.0
    %1571 = vmatpush1.msra.mxu0 0.0
    %1572 = vmatprep.subr.mxu0 0.0
    %1573 = vmatpush1.msra.mxu0 0.0
    %1574 = vmatprep.subr.mxu0 0.0
    %1575 = vmatpush1.msra.mxu0 0.0
    %1576 = vmatprep.subr.mxu0 0.0
    %1577 = vmatpush1.msra.mxu0 0.0
    %1578 = vmatprep.subr.mxu0 0.0
    %1579 = vmatpush1.msra.mxu0 0.0
    %1580 = vmatprep.subr.mxu0 0.0
    %1581 = vmatpush1.msra.mxu0 0.0
    %1582 = vmatprep.subr.mxu0 0.0
    %1583 = vmatpush1.msra.mxu0 0.0
    %1584 = vmatprep.subr.mxu0 0.0
    %1585 = vmatpush1.msra.mxu0 0.0
    %1586 = vmatprep.subr.mxu0 0.0
    %1587 = vmatpush1.msra.mxu0 0.0
    %1588 = vmatprep.subr.mxu0 0.0
    %1589 = vmatpush1.msra.mxu0 0.0
    %1590 = vmatprep.subr.mxu0 0.0
    %1591 = vmatpush1.msra.mxu0 0.0
    %1592 = vmatprep.subr.mxu0 0.0
    %1593 = vmatpush1.msra.mxu0 0.0
    %1594 = vmatprep.subr.mxu0 0.0
    %1595 = vmatpush1.msra.mxu0 0.0
    %1596 = vmatprep.subr.mxu0 0.0
    %1597 = vmatpush1.msra.mxu0 0.0
    %1598 = vmatprep.subr.mxu0 0.0
    %1599 = vmatpush1.msra.mxu0 0.0
    %1600 = vmatprep.subr.mxu0 0.0
    %1601 = vmatpush1.msra.mxu0 0.0
    %1602 = vmatprep.subr.mxu0 0.0
    %1603 = vmatpush1.msra.mxu0 0.0
    %1604 = vmatprep.subr.mxu0 0.0
    %1605 = vmatpush1.msra.mxu0 0.0
    %1606 = vmatprep.subr.mxu0 0.0
    %1607 = vmatpush1.msra.mxu0 0.0
    %1608 = vmatprep.mubr.f32.mxu0 0.0
    %1609 = vmatmul.mubr.f32.gmra.mrb[0].mxu0 %v1536
    %v1610 = vpop.f32.mrb[0].mxu0
    %v1611 = vadd.f32 0.0, %v1610
    %v1612 = vpop.f32.mrb[0].mxu0
    %1613 = vmatprep.mubr.f32.mxu0 0.0
    %1614 = vmatmul.mubr.f32.gmra.mrb[0].mxu0 %v1538
    %v1615 = vpop.f32.mrb[0].mxu0
    %v1616 = vpop.f32.mrb[0].mxu0
    %1617 = vmatprep.mubr.f32.mxu0 0.0
    %1618 = vmatmul.mubr.f32.gmra.mrb[0].mxu0 %v1540
    %v1619 = vpop.f32.mrb[0].mxu0
    %v1620 = vpop.f32.mrb[0].mxu0
    %1621 = vmatprep.mubr.f32.mxu0 0.0
    %1622 = vmatmul.mubr.f32.gmra.mrb[0].mxu0 %v1542
    %v1623 = vpop.f32.mrb[0].mxu0
    %v1624 = vadd.f32 0.0, %v1623
    %v1625 = vpop.f32.mrb[0].mxu0
    %1626 = vdwg.mxu0
    %v1627 = vadd.f32 %v1516, %v1611
    %v1628 = vadd.f32 %v1517, %v1624
    %s1629 = scalar_lea.vmem %s5, 320
    %v1630 = vld [vmem:[%s1629] sm:$0xff]
    %v1631 = vld [vmem:[%s1629 + $0x8] sm:$0xff]
    %v1632 = vld [vmem:[%s1629 + $0x10] sm:$0xff]
    %v1633 = vld [vmem:[%s1629 + $0x18] sm:$0xff]
    %v1634 = vld [vmem:[%s1629 + $0x20] sm:$0xff]
    %v1635 = vld [vmem:[%s1629 + $0x28] sm:$0xff]
    %v1636 = vld [vmem:[%s1629 + $0x30] sm:$0xff]
    %v1637 = vld [vmem:[%s1629 + $0x38] sm:$0xff]
    %v1638 = vrot.slane %v1065, 7
    %v1639 = vrot.slane %v1066, 7
    %v1640 = vsel %vm392, %v1638, %v1639
    %v1641 = vrot.slane %v1067, 7
    %v1642 = vsel %vm392, %v1639, %v1641
    %v1643 = vrot.slane %v1068, 7
    %v1644 = vsel %vm392, %v1641, %v1643
    %v1645 = vrot.slane %v1069, 7
    %v1646 = vsel %vm392, %v1643, %v1645
    %v1647 = vsel %vm372, %v1640, 0
    %v1649 = vsel %vm372, %v1642, 0
    %v1651 = vsel %vm372, %v1644, 0
    %v1653 = vsel %vm372, %v1646, 0
    %1655 = vmatprep.subr.mxu0 0.0
    %1656 = vmatpush1.msra.mxu0 %v1630
    %1657 = vmatprep.subr.mxu0 0.0
    %1658 = vmatpush1.msra.mxu0 %v1631
    %1659 = vmatprep.subr.mxu0 0.0
    %1660 = vmatpush1.msra.mxu0 %v1632
    %1661 = vmatprep.subr.mxu0 0.0
    %1662 = vmatpush1.msra.mxu0 %v1633
    %1663 = vmatprep.subr.mxu0 0.0
    %1664 = vmatpush1.msra.mxu0 %v1634
    %1665 = vmatprep.subr.mxu0 0.0
    %1666 = vmatpush1.msra.mxu0 %v1635
    %1667 = vmatprep.subr.mxu0 0.0
    %1668 = vmatpush1.msra.mxu0 %v1636
    %1669 = vmatprep.subr.mxu0 0.0
    %1670 = vmatpush1.msra.mxu0 %v1637
    %1671 = vmatprep.subr.mxu0 0.0
    %1672 = vmatpush1.msra.mxu0 0.0
    %1673 = vmatprep.subr.mxu0 0.0
    %1674 = vmatpush1.msra.mxu0 0.0
    %1675 = vmatprep.subr.mxu0 0.0
    %1676 = vmatpush1.msra.mxu0 0.0
    %1677 = vmatprep.subr.mxu0 0.0
    %1678 = vmatpush1.msra.mxu0 0.0
    %1679 = vmatprep.subr.mxu0 0.0
    %1680 = vmatpush1.msra.mxu0 0.0
    %1681 = vmatprep.subr.mxu0 0.0
    %1682 = vmatpush1.msra.mxu0 0.0
    %1683 = vmatprep.subr.mxu0 0.0
    %1684 = vmatpush1.msra.mxu0 0.0
    %1685 = vmatprep.subr.mxu0 0.0
    %1686 = vmatpush1.msra.mxu0 0.0
    %1687 = vmatprep.subr.mxu0 0.0
    %1688 = vmatpush1.msra.mxu0 0.0
    %1689 = vmatprep.subr.mxu0 0.0
    %1690 = vmatpush1.msra.mxu0 0.0
    %1691 = vmatprep.subr.mxu0 0.0
    %1692 = vmatpush1.msra.mxu0 0.0
    %1693 = vmatprep.subr.mxu0 0.0
    %1694 = vmatpush1.msra.mxu0 0.0
    %1695 = vmatprep.subr.mxu0 0.0
    %1696 = vmatpush1.msra.mxu0 0.0
    %1697 = vmatprep.subr.mxu0 0.0
    %1698 = vmatpush1.msra.mxu0 0.0
    %1699 = vmatprep.subr.mxu0 0.0
    %1700 = vmatpush1.msra.mxu0 0.0
    %1701 = vmatprep.subr.mxu0 0.0
    %1702 = vmatpush1.msra.mxu0 0.0
    %1703 = vmatprep.subr.mxu0 0.0
    %1704 = vmatpush1.msra.mxu0 0.0
    %1705 = vmatprep.subr.mxu0 0.0
    %1706 = vmatpush1.msra.mxu0 0.0
    %1707 = vmatprep.subr.mxu0 0.0
    %1708 = vmatpush1.msra.mxu0 0.0
    %1709 = vmatprep.subr.mxu0 0.0
    %1710 = vmatpush1.msra.mxu0 0.0
    %1711 = vmatprep.subr.mxu0 0.0
    %1712 = vmatpush1.msra.mxu0 0.0
    %1713 = vmatprep.subr.mxu0 0.0
    %1714 = vmatpush1.msra.mxu0 0.0
    %1715 = vmatprep.subr.mxu0 0.0
    %1716 = vmatpush1.msra.mxu0 0.0
    %1717 = vmatprep.subr.mxu0 0.0
    %1718 = vmatpush1.msra.mxu0 0.0
    %1719 = vmatprep.mubr.f32.mxu0 0.0
    %1720 = vmatmul.mubr.f32.gmra.mrb[0].mxu0 %v1647
    %v1721 = vpop.f32.mrb[0].mxu0
    %v1722 = vadd.f32 0.0, %v1721
    %v1723 = vpop.f32.mrb[0].mxu0
    %1724 = vmatprep.mubr.f32.mxu0 0.0
    %1725 = vmatmul.mubr.f32.gmra.mrb[0].mxu0 %v1649
    %v1726 = vpop.f32.mrb[0].mxu0
    %v1727 = vpop.f32.mrb[0].mxu0
    %1728 = vmatprep.mubr.f32.mxu0 0.0
    %1729 = vmatmul.mubr.f32.gmra.mrb[0].mxu0 %v1651
    %v1730 = vpop.f32.mrb[0].mxu0
    %v1731 = vpop.f32.mrb[0].mxu0
    %1732 = vmatprep.mubr.f32.mxu0 0.0
    %1733 = vmatmul.mubr.f32.gmra.mrb[0].mxu0 %v1653
    %v1734 = vpop.f32.mrb[0].mxu0
    %v1735 = vadd.f32 0.0, %v1734
    %v1736 = vpop.f32.mrb[0].mxu0
    %1737 = vdwg.mxu0
    %v1738 = vadd.f32 %v1627, %v1722
    %v1739 = vadd.f32 %v1628, %v1735
    %s1740 = scalar_lea.vmem %s5, 384
    %v1741 = vld [vmem:[%s1740] sm:$0xff]
    %v1742 = vld [vmem:[%s1740 + $0x8] sm:$0xff]
    %v1743 = vld [vmem:[%s1740 + $0x10] sm:$0xff]
    %v1744 = vld [vmem:[%s1740 + $0x18] sm:$0xff]
    %v1745 = vld [vmem:[%s1740 + $0x20] sm:$0xff]
    %v1746 = vld [vmem:[%s1740 + $0x28] sm:$0xff]
    %v1747 = vld [vmem:[%s1740 + $0x30] sm:$0xff]
    %v1748 = vld [vmem:[%s1740 + $0x38] sm:$0xff]
    %v1750 = vrot.slane %v1070, 2
    %v1751 = vsel %vm1303, %v1311, %v1750
    %v1752 = vsel %vm372, %v1751, 0
    %1754 = vmatprep.subr.mxu0 0.0
    %1755 = vmatpush1.msra.mxu0 %v1741
    %1756 = vmatprep.subr.mxu0 0.0
    %1757 = vmatpush1.msra.mxu0 %v1742
    %1758 = vmatprep.subr.mxu0 0.0
    %1759 = vmatpush1.msra.mxu0 %v1743
    %1760 = vmatprep.subr.mxu0 0.0
    %1761 = vmatpush1.msra.mxu0 %v1744
    %1762 = vmatprep.subr.mxu0 0.0
    %1763 = vmatpush1.msra.mxu0 %v1745
    %1764 = vmatprep.subr.mxu0 0.0
    %1765 = vmatpush1.msra.mxu0 %v1746
    %1766 = vmatprep.subr.mxu0 0.0
    %1767 = vmatpush1.msra.mxu0 %v1747
    %1768 = vmatprep.subr.mxu0 0.0
    %1769 = vmatpush1.msra.mxu0 %v1748
    %1770 = vmatprep.subr.mxu0 0.0
    %1771 = vmatpush1.msra.mxu0 0.0
    %1772 = vmatprep.subr.mxu0 0.0
    %1773 = vmatpush1.msra.mxu0 0.0
    %1774 = vmatprep.subr.mxu0 0.0
    %1775 = vmatpush1.msra.mxu0 0.0
    %1776 = vmatprep.subr.mxu0 0.0
    %1777 = vmatpush1.msra.mxu0 0.0
    %1778 = vmatprep.subr.mxu0 0.0
    %1779 = vmatpush1.msra.mxu0 0.0
    %1780 = vmatprep.subr.mxu0 0.0
    %1781 = vmatpush1.msra.mxu0 0.0
    %1782 = vmatprep.subr.mxu0 0.0
    %1783 = vmatpush1.msra.mxu0 0.0
    %1784 = vmatprep.subr.mxu0 0.0
    %1785 = vmatpush1.msra.mxu0 0.0
    %1786 = vmatprep.subr.mxu0 0.0
    %1787 = vmatpush1.msra.mxu0 0.0
    %1788 = vmatprep.subr.mxu0 0.0
    %1789 = vmatpush1.msra.mxu0 0.0
    %1790 = vmatprep.subr.mxu0 0.0
    %1791 = vmatpush1.msra.mxu0 0.0
    %1792 = vmatprep.subr.mxu0 0.0
    %1793 = vmatpush1.msra.mxu0 0.0
    %1794 = vmatprep.subr.mxu0 0.0
    %1795 = vmatpush1.msra.mxu0 0.0
    %1796 = vmatprep.subr.mxu0 0.0
    %1797 = vmatpush1.msra.mxu0 0.0
    %1798 = vmatprep.subr.mxu0 0.0
    %1799 = vmatpush1.msra.mxu0 0.0
    %1800 = vmatprep.subr.mxu0 0.0
    %1801 = vmatpush1.msra.mxu0 0.0
    %1802 = vmatprep.subr.mxu0 0.0
    %1803 = vmatpush1.msra.mxu0 0.0
    %1804 = vmatprep.subr.mxu0 0.0
    %1805 = vmatpush1.msra.mxu0 0.0
    %1806 = vmatprep.subr.mxu0 0.0
    %1807 = vmatpush1.msra.mxu0 0.0
    %1808 = vmatprep.subr.mxu0 0.0
    %1809 = vmatpush1.msra.mxu0 0.0
    %1810 = vmatprep.subr.mxu0 0.0
    %1811 = vmatpush1.msra.mxu0 0.0
    %1812 = vmatprep.subr.mxu0 0.0
    %1813 = vmatpush1.msra.mxu0 0.0
    %1814 = vmatprep.subr.mxu0 0.0
    %1815 = vmatpush1.msra.mxu0 0.0
    %1816 = vmatprep.subr.mxu0 0.0
    %1817 = vmatpush1.msra.mxu0 0.0
    %1818 = vmatprep.mubr.f32.mxu0 0.0
    %1819 = vmatmul.mubr.f32.gmra.mrb[0].mxu0 %v1315
    %v1820 = vpop.f32.mrb[0].mxu0
    %v1821 = vadd.f32 0.0, %v1820
    %v1822 = vpop.f32.mrb[0].mxu0
    %1823 = vmatprep.mubr.f32.mxu0 0.0
    %1824 = vmatmul.mubr.f32.gmra.mrb[0].mxu0 %v1317
    %v1825 = vpop.f32.mrb[0].mxu0
    %v1826 = vpop.f32.mrb[0].mxu0
    %1827 = vmatprep.mubr.f32.mxu0 0.0
    %1828 = vmatmul.mubr.f32.gmra.mrb[0].mxu0 %v1319
    %v1829 = vpop.f32.mrb[0].mxu0
    %v1830 = vpop.f32.mrb[0].mxu0
    %1831 = vmatprep.mubr.f32.mxu0 0.0
    %1832 = vmatmul.mubr.f32.gmra.mrb[0].mxu0 %v1752
    %v1833 = vpop.f32.mrb[0].mxu0
    %v1834 = vadd.f32 0.0, %v1833
    %v1835 = vpop.f32.mrb[0].mxu0
    %1836 = vdwg.mxu0
    %v1837 = vadd.f32 %v1738, %v1821
    %v1838 = vadd.f32 %v1739, %v1834
    %s1839 = scalar_lea.vmem %s5, 448
    %v1840 = vld [vmem:[%s1839] sm:$0xff]
    %v1841 = vld [vmem:[%s1839 + $0x8] sm:$0xff]
    %v1842 = vld [vmem:[%s1839 + $0x10] sm:$0xff]
    %v1843 = vld [vmem:[%s1839 + $0x18] sm:$0xff]
    %v1844 = vld [vmem:[%s1839 + $0x20] sm:$0xff]
    %v1845 = vld [vmem:[%s1839 + $0x28] sm:$0xff]
    %v1846 = vld [vmem:[%s1839 + $0x30] sm:$0xff]
    %v1847 = vld [vmem:[%s1839 + $0x38] sm:$0xff]
    %vm1848 = vcmask 1044480
    %v1849 = vrot.slane %v1066, 3
    %v1850 = vrot.slane %v1067, 3
    %v1851 = vsel %vm1848, %v1849, %v1850
    %v1852 = vrot.slane %v1068, 3
    %v1853 = vsel %vm1848, %v1850, %v1852
    %v1854 = vrot.slane %v1069, 3
    %v1855 = vsel %vm1848, %v1852, %v1854
    %v1856 = vrot.slane %v1070, 3
    %v1857 = vsel %vm1848, %v1854, %v1856
    %v1858 = vsel %vm372, %v1851, 0
    %v1860 = vsel %vm372, %v1853, 0
    %v1862 = vsel %vm372, %v1855, 0
    %v1864 = vsel %vm372, %v1857, 0
    %1866 = vmatprep.subr.mxu0 0.0
    %1867 = vmatpush1.msra.mxu0 %v1840
    %1868 = vmatprep.subr.mxu0 0.0
    %1869 = vmatpush1.msra.mxu0 %v1841
    %1870 = vmatprep.subr.mxu0 0.0
    %1871 = vmatpush1.msra.mxu0 %v1842
    %1872 = vmatprep.subr.mxu0 0.0
    %1873 = vmatpush1.msra.mxu0 %v1843
    %1874 = vmatprep.subr.mxu0 0.0
    %1875 = vmatpush1.msra.mxu0 %v1844
    %1876 = vmatprep.subr.mxu0 0.0
    %1877 = vmatpush1.msra.mxu0 %v1845
    %1878 = vmatprep.subr.mxu0 0.0
    %1879 = vmatpush1.msra.mxu0 %v1846
    %1880 = vmatprep.subr.mxu0 0.0
    %1881 = vmatpush1.msra.mxu0 %v1847
    %1882 = vmatprep.subr.mxu0 0.0
    %1883 = vmatpush1.msra.mxu0 0.0
    %1884 = vmatprep.subr.mxu0 0.0
    %1885 = vmatpush1.msra.mxu0 0.0
    %1886 = vmatprep.subr.mxu0 0.0
    %1887 = vmatpush1.msra.mxu0 0.0
    %1888 = vmatprep.subr.mxu0 0.0
    %1889 = vmatpush1.msra.mxu0 0.0
    %1890 = vmatprep.subr.mxu0 0.0
    %1891 = vmatpush1.msra.mxu0 0.0
    %1892 = vmatprep.subr.mxu0 0.0
    %1893 = vmatpush1.msra.mxu0 0.0
    %1894 = vmatprep.subr.mxu0 0.0
    %1895 = vmatpush1.msra.mxu0 0.0
    %1896 = vmatprep.subr.mxu0 0.0
    %1897 = vmatpush1.msra.mxu0 0.0
    %1898 = vmatprep.subr.mxu0 0.0
    %1899 = vmatpush1.msra.mxu0 0.0
    %1900 = vmatprep.subr.mxu0 0.0
    %1901 = vmatpush1.msra.mxu0 0.0
    %1902 = vmatprep.subr.mxu0 0.0
    %1903 = vmatpush1.msra.mxu0 0.0
    %1904 = vmatprep.subr.mxu0 0.0
    %1905 = vmatpush1.msra.mxu0 0.0
    %1906 = vmatprep.subr.mxu0 0.0
    %1907 = vmatpush1.msra.mxu0 0.0
    %1908 = vmatprep.subr.mxu0 0.0
    %1909 = vmatpush1.msra.mxu0 0.0
    %1910 = vmatprep.subr.mxu0 0.0
    %1911 = vmatpush1.msra.mxu0 0.0
    %1912 = vmatprep.subr.mxu0 0.0
    %1913 = vmatpush1.msra.mxu0 0.0
    %1914 = vmatprep.subr.mxu0 0.0
    %1915 = vmatpush1.msra.mxu0 0.0
    %1916 = vmatprep.subr.mxu0 0.0
    %1917 = vmatpush1.msra.mxu0 0.0
    %1918 = vmatprep.subr.mxu0 0.0
    %1919 = vmatpush1.msra.mxu0 0.0
    %1920 = vmatprep.subr.mxu0 0.0
    %1921 = vmatpush1.msra.mxu0 0.0
    %1922 = vmatprep.subr.mxu0 0.0
    %1923 = vmatpush1.msra.mxu0 0.0
    %1924 = vmatprep.subr.mxu0 0.0
    %1925 = vmatpush1.msra.mxu0 0.0
    %1926 = vmatprep.subr.mxu0 0.0
    %1927 = vmatpush1.msra.mxu0 0.0
    %1928 = vmatprep.subr.mxu0 0.0
    %1929 = vmatpush1.msra.mxu0 0.0
    %1930 = vmatprep.mubr.f32.mxu0 0.0
    %1931 = vmatmul.mubr.f32.gmra.mrb[0].mxu0 %v1858
    %v1932 = vpop.f32.mrb[0].mxu0
    %v1933 = vadd.f32 0.0, %v1932
    %v1934 = vpop.f32.mrb[0].mxu0
    %1935 = vmatprep.mubr.f32.mxu0 0.0
    %1936 = vmatmul.mubr.f32.gmra.mrb[0].mxu0 %v1860
    %v1937 = vpop.f32.mrb[0].mxu0
    %v1938 = vpop.f32.mrb[0].mxu0
    %1939 = vmatprep.mubr.f32.mxu0 0.0
    %1940 = vmatmul.mubr.f32.gmra.mrb[0].mxu0 %v1862
    %v1941 = vpop.f32.mrb[0].mxu0
    %v1942 = vpop.f32.mrb[0].mxu0
    %1943 = vmatprep.mubr.f32.mxu0 0.0
    %1944 = vmatmul.mubr.f32.gmra.mrb[0].mxu0 %v1864
    %v1945 = vpop.f32.mrb[0].mxu0
    %v1946 = vadd.f32 0.0, %v1945
    %v1947 = vpop.f32.mrb[0].mxu0
    %1948 = vdwg.mxu0
    %v1949 = vadd.f32 %v1837, %v1933
    %v1950 = vadd.f32 %v1838, %v1946
    %s1951 = scalar_lea.vmem %s5, 512
    %v1952 = vld [vmem:[%s1951] sm:$0xff]
    %v1953 = vld [vmem:[%s1951 + $0x8] sm:$0xff]
    %v1954 = vld [vmem:[%s1951 + $0x10] sm:$0xff]
    %v1955 = vld [vmem:[%s1951 + $0x18] sm:$0xff]
    %v1956 = vld [vmem:[%s1951 + $0x20] sm:$0xff]
    %v1957 = vld [vmem:[%s1951 + $0x28] sm:$0xff]
    %v1958 = vld [vmem:[%s1951 + $0x30] sm:$0xff]
    %v1959 = vld [vmem:[%s1951 + $0x38] sm:$0xff]
    %vm1960 = vcmask 1043456
    %v1961 = vrot.slane %v1066, 4
    %v1962 = vrot.slane %v1067, 4
    %v1963 = vsel %vm1960, %v1961, %v1962
    %v1964 = vrot.slane %v1068, 4
    %v1965 = vsel %vm1960, %v1962, %v1964
    %v1966 = vrot.slane %v1069, 4
    %v1967 = vsel %vm1960, %v1964, %v1966
    %v1968 = vrot.slane %v1070, 4
    %v1969 = vsel %vm1960, %v1966, %v1968
    %v1970 = vsel %vm372, %v1963, 0
    %v1972 = vsel %vm372, %v1965, 0
    %v1974 = vsel %vm372, %v1967, 0
    %v1976 = vsel %vm372, %v1969, 0
    %1978 = vmatprep.subr.mxu0 0.0
    %1979 = vmatpush1.msra.mxu0 %v1952
    %1980 = vmatprep.subr.mxu0 0.0
    %1981 = vmatpush1.msra.mxu0 %v1953
    %1982 = vmatprep.subr.mxu0 0.0
    %1983 = vmatpush1.msra.mxu0 %v1954
    %1984 = vmatprep.subr.mxu0 0.0
    %1985 = vmatpush1.msra.mxu0 %v1955
    %1986 = vmatprep.subr.mxu0 0.0
    %1987 = vmatpush1.msra.mxu0 %v1956
    %1988 = vmatprep.subr.mxu0 0.0
    %1989 = vmatpush1.msra.mxu0 %v1957
    %1990 = vmatprep.subr.mxu0 0.0
    %1991 = vmatpush1.msra.mxu0 %v1958
    %1992 = vmatprep.subr.mxu0 0.0
    %1993 = vmatpush1.msra.mxu0 %v1959
    %1994 = vmatprep.subr.mxu0 0.0
    %1995 = vmatpush1.msra.mxu0 0.0
    %1996 = vmatprep.subr.mxu0 0.0
    %1997 = vmatpush1.msra.mxu0 0.0
    %1998 = vmatprep.subr.mxu0 0.0
    %1999 = vmatpush1.msra.mxu0 0.0
    %2000 = vmatprep.subr.mxu0 0.0
    %2001 = vmatpush1.msra.mxu0 0.0
    %2002 = vmatprep.subr.mxu0 0.0
    %2003 = vmatpush1.msra.mxu0 0.0
    %2004 = vmatprep.subr.mxu0 0.0
    %2005 = vmatpush1.msra.mxu0 0.0
    %2006 = vmatprep.subr.mxu0 0.0
    %2007 = vmatpush1.msra.mxu0 0.0
    %2008 = vmatprep.subr.mxu0 0.0
    %2009 = vmatpush1.msra.mxu0 0.0
    %2010 = vmatprep.subr.mxu0 0.0
    %2011 = vmatpush1.msra.mxu0 0.0
    %2012 = vmatprep.subr.mxu0 0.0
    %2013 = vmatpush1.msra.mxu0 0.0
    %2014 = vmatprep.subr.mxu0 0.0
    %2015 = vmatpush1.msra.mxu0 0.0
    %2016 = vmatprep.subr.mxu0 0.0
    %2017 = vmatpush1.msra.mxu0 0.0
    %2018 = vmatprep.subr.mxu0 0.0
    %2019 = vmatpush1.msra.mxu0 0.0
    %2020 = vmatprep.subr.mxu0 0.0
    %2021 = vmatpush1.msra.mxu0 0.0
    %2022 = vmatprep.subr.mxu0 0.0
    %2023 = vmatpush1.msra.mxu0 0.0
    %2024 = vmatprep.subr.mxu0 0.0
    %2025 = vmatpush1.msra.mxu0 0.0
    %2026 = vmatprep.subr.mxu0 0.0
    %2027 = vmatpush1.msra.mxu0 0.0
    %2028 = vmatprep.subr.mxu0 0.0
    %2029 = vmatpush1.msra.mxu0 0.0
    %2030 = vmatprep.subr.mxu0 0.0
    %2031 = vmatpush1.msra.mxu0 0.0
    %2032 = vmatprep.subr.mxu0 0.0
    %2033 = vmatpush1.msra.mxu0 0.0
    %2034 = vmatprep.subr.mxu0 0.0
    %2035 = vmatpush1.msra.mxu0 0.0
    %2036 = vmatprep.subr.mxu0 0.0
    %2037 = vmatpush1.msra.mxu0 0.0
    %2038 = vmatprep.subr.mxu0 0.0
    %2039 = vmatpush1.msra.mxu0 0.0
    %2040 = vmatprep.subr.mxu0 0.0
    %2041 = vmatpush1.msra.mxu0 0.0
    %2042 = vmatprep.mubr.f32.mxu0 0.0
    %2043 = vmatmul.mubr.f32.gmra.mrb[0].mxu0 %v1970
    %v2044 = vpop.f32.mrb[0].mxu0
    %v2045 = vadd.f32 0.0, %v2044
    %v2046 = vpop.f32.mrb[0].mxu0
    %2047 = vmatprep.mubr.f32.mxu0 0.0
    %2048 = vmatmul.mubr.f32.gmra.mrb[0].mxu0 %v1972
    %v2049 = vpop.f32.mrb[0].mxu0
    %v2050 = vpop.f32.mrb[0].mxu0
    %2051 = vmatprep.mubr.f32.mxu0 0.0
    %2052 = vmatmul.mubr.f32.gmra.mrb[0].mxu0 %v1974
    %v2053 = vpop.f32.mrb[0].mxu0
    %v2054 = vpop.f32.mrb[0].mxu0
    %2055 = vmatprep.mubr.f32.mxu0 0.0
    %2056 = vmatmul.mubr.f32.gmra.mrb[0].mxu0 %v1976
    %v2057 = vpop.f32.mrb[0].mxu0
    %v2058 = vadd.f32 0.0, %v2057
    %v2059 = vpop.f32.mrb[0].mxu0
    %2060 = vdwg.mxu0
    %v2061 = vadd.f32 %v1949, %v2045
    %v2062 = vadd.f32 %v1950, %v2058
    %v2063 = vmax.f32 %v2061, 0.0
    %v2064 = vmax.f32 %v2062, 0.0
    %v2066 = vrot.slane %v2063, 1
    %2067 = vrot.lane.b32.xlu0 %v2066, 64
    %v2068 = vpop.permute.xlu0 %2067
    %v2070 = vrot.slane %v2063, 5
    %v2072 = vrot.slane %v2063, 6
    %2073 = vrot.lane.b32.xlu0 %v2072, 64
    %v2074 = vpop.permute.xlu0 %2073
    %v2076 = vsel %vm372, %v2063, %v2068
    %v2077 = vsel %vm372, %v2070, %v2074
    %v2079 = vrot.slane %v2064, 1
    %2080 = vrot.lane.b32.xlu0 %v2079, 64
    %v2081 = vpop.permute.xlu0 %2080
    %v2083 = vrot.slane %v2064, 5
    %v2085 = vrot.slane %v2064, 6
    %2086 = vrot.lane.b32.xlu0 %v2085, 64
    %v2087 = vpop.permute.xlu0 %2086
    %v2089 = vsel %vm372, %v2064, %v2081
    %v2090 = vsel %vm372, %v2083, %v2087
    %v2091 = vsel %vm392, %v2076, %v2089
    %v2092 = vsel %vm392, %v2077, %v2090
    %v2093 = vld [vmem:[%s7] sm:$0xff]
    %v2094 = vld [vmem:[%s7 + $0x8] sm:$0xff]
    %v2095 = vld [vmem:[%s7 + $0x10] sm:$0xff]
    %v2096 = vld [vmem:[%s7 + $0x18] sm:$0xff]
    %v2097 = vld [vmem:[%s7 + $0x20] sm:$0xff]
    %v2098 = vld [vmem:[%s7 + $0x28] sm:$0xff]
    %v2099 = vld [vmem:[%s7 + $0x30] sm:$0xff]
    %v2100 = vld [vmem:[%s7 + $0x38] sm:$0xff]
    %v2101 = vld [vmem:[%s7 + $0x40] sm:$0xff]
    %v2102 = vld [vmem:[%s7 + $0x48] sm:$0xff]
    %v2103 = vld [vmem:[%s7 + $0x50] sm:$0xff]
    %v2104 = vld [vmem:[%s7 + $0x58] sm:$0xff]
    %v2105 = vld [vmem:[%s7 + $0x60] sm:$0xff]
    %v2106 = vld [vmem:[%s7 + $0x68] sm:$0xff]
    %v2107 = vld [vmem:[%s7 + $0x70] sm:$0xff]
    %v2108 = vld [vmem:[%s7 + $0x78] sm:$0xff]
    %v2109 = vld [vmem:[%s7 + $0x80] sm:$0xff]
    %v2110 = vld [vmem:[%s7 + $0x88] sm:$0xff]
    %v2111 = vld [vmem:[%s7 + $0x90] sm:$0xff]
    %v2112 = vld [vmem:[%s7 + $0x98] sm:$0xff]
    %v2113 = vld [vmem:[%s7 + $0xa0] sm:$0xff]
    %v2114 = vld [vmem:[%s7 + $0xa8] sm:$0xff]
    %v2115 = vld [vmem:[%s7 + $0xb0] sm:$0xff]
    %v2116 = vld [vmem:[%s7 + $0xb8] sm:$0xff]
    %v2117 = vld [vmem:[%s7 + $0xc0] sm:$0xff]
    %v2118 = vld [vmem:[%s7 + $0xc8] sm:$0xff]
    %v2119 = vld [vmem:[%s7 + $0xd0] sm:$0xff]
    %v2120 = vld [vmem:[%s7 + $0xd8] sm:$0xff]
    %v2121 = vld [vmem:[%s7 + $0xe0] sm:$0xff]
    %v2122 = vld [vmem:[%s7 + $0xe8] sm:$0xff]
    %v2123 = vld [vmem:[%s7 + $0xf0] sm:$0xff]
    %v2124 = vld [vmem:[%s7 + $0xf8] sm:$0xff]
    %v2125 = vld [vmem:[%s8] sm:$0x1]
    %v2127 = vlaneseq
    %v2128 = vshrl.u32 %v2127, 7
    %v2129 = vsub.s32 0, %v2128
    %v2130 = vrot.slane %v2125, %v2129
    %2132 = vmatprep.subr.mxu0 0.0
    %2133 = vmatpush1.msra.mxu0 %v2093
    %2134 = vmatprep.subr.mxu0 0.0
    %2135 = vmatpush1.msra.mxu0 %v2094
    %2136 = vmatprep.subr.mxu0 0.0
    %2137 = vmatpush1.msra.mxu0 %v2095
    %2138 = vmatprep.subr.mxu0 0.0
    %2139 = vmatpush1.msra.mxu0 %v2096
    %2140 = vmatprep.subr.mxu0 0.0
    %2141 = vmatpush1.msra.mxu0 %v2097
    %2142 = vmatprep.subr.mxu0 0.0
    %2143 = vmatpush1.msra.mxu0 %v2098
    %2144 = vmatprep.subr.mxu0 0.0
    %2145 = vmatpush1.msra.mxu0 %v2099
    %2146 = vmatprep.subr.mxu0 0.0
    %2147 = vmatpush1.msra.mxu0 %v2100
    %2148 = vmatprep.subr.mxu0 0.0
    %2149 = vmatpush1.msra.mxu0 %v2101
    %2150 = vmatprep.subr.mxu0 0.0
    %2151 = vmatpush1.msra.mxu0 %v2102
    %2152 = vmatprep.subr.mxu0 0.0
    %2153 = vmatpush1.msra.mxu0 %v2103
    %2154 = vmatprep.subr.mxu0 0.0
    %2155 = vmatpush1.msra.mxu0 %v2104
    %2156 = vmatprep.subr.mxu0 0.0
    %2157 = vmatpush1.msra.mxu0 %v2105
    %2158 = vmatprep.subr.mxu0 0.0
    %2159 = vmatpush1.msra.mxu0 %v2106
    %2160 = vmatprep.subr.mxu0 0.0
    %2161 = vmatpush1.msra.mxu0 %v2107
    %2162 = vmatprep.subr.mxu0 0.0
    %2163 = vmatpush1.msra.mxu0 %v2108
    %2164 = vmatprep.subr.mxu0 0.0
    %2165 = vmatpush1.msra.mxu0 %v2109
    %2166 = vmatprep.subr.mxu0 0.0
    %2167 = vmatpush1.msra.mxu0 %v2110
    %2168 = vmatprep.subr.mxu0 0.0
    %2169 = vmatpush1.msra.mxu0 %v2111
    %2170 = vmatprep.subr.mxu0 0.0
    %2171 = vmatpush1.msra.mxu0 %v2112
    %2172 = vmatprep.subr.mxu0 0.0
    %2173 = vmatpush1.msra.mxu0 %v2113
    %2174 = vmatprep.subr.mxu0 0.0
    %2175 = vmatpush1.msra.mxu0 %v2114
    %2176 = vmatprep.subr.mxu0 0.0
    %2177 = vmatpush1.msra.mxu0 %v2115
    %2178 = vmatprep.subr.mxu0 0.0
    %2179 = vmatpush1.msra.mxu0 %v2116
    %2180 = vmatprep.subr.mxu0 0.0
    %2181 = vmatpush1.msra.mxu0 %v2117
    %2182 = vmatprep.subr.mxu0 0.0
    %2183 = vmatpush1.msra.mxu0 %v2118
    %2184 = vmatprep.subr.mxu0 0.0
    %2185 = vmatpush1.msra.mxu0 %v2119
    %2186 = vmatprep.subr.mxu0 0.0
    %2187 = vmatpush1.msra.mxu0 %v2120
    %2188 = vmatprep.subr.mxu0 0.0
    %2189 = vmatpush1.msra.mxu0 %v2121
    %2190 = vmatprep.subr.mxu0 0.0
    %2191 = vmatpush1.msra.mxu0 %v2122
    %2192 = vmatprep.subr.mxu0 0.0
    %2193 = vmatpush1.msra.mxu0 %v2123
    %2194 = vmatprep.subr.mxu0 0.0
    %2195 = vmatpush1.msra.mxu0 %v2124
    %2196 = vmatprep.mubr.f32.mxu0 %v2092
    %2197 = vmatmul.mubr.f32.gmra.mrb[0].mxu0 %v2091
    %v2198 = vpop.f32.mrb[0].mxu0
    %v2199 = vadd.f32 %v2130, %v2198
    %v2200 = vpop.f32.mrb[0].mxu0
    %2201 = vdwg.mxu0
    %v2202 = vmax.f32 %v2199, 0.0
    %v2203 = vld [vmem:[%s9] sm:$0xff]
    %v2204 = vld [vmem:[%s9 + $0x8] sm:$0xff]
    %v2205 = vld [vmem:[%s9 + $0x10] sm:$0xff]
    %v2206 = vld [vmem:[%s9 + $0x18] sm:$0xff]
    %v2207 = vld [vmem:[%s9 + $0x20] sm:$0xff]
    %v2208 = vld [vmem:[%s9 + $0x28] sm:$0xff]
    %v2209 = vld [vmem:[%s9 + $0x30] sm:$0xff]
    %v2210 = vld [vmem:[%s9 + $0x38] sm:$0xff]
    %v2211 = vld [vmem:[%s9 + $0x40] sm:$0xff]
    %v2212 = vld [vmem:[%s9 + $0x48] sm:$0xff]
    %v2213 = vld [vmem:[%s9 + $0x50] sm:$0xff]
    %v2214 = vld [vmem:[%s9 + $0x58] sm:$0xff]
    %v2215 = vld [vmem:[%s9 + $0x60] sm:$0xff]
    %v2216 = vld [vmem:[%s9 + $0x68] sm:$0xff]
    %v2217 = vld [vmem:[%s9 + $0x70] sm:$0xff]
    %v2218 = vld [vmem:[%s9 + $0x78] sm:$0xff]
    %v2219 = vld [vmem:[%s10] sm:$0x1]
    %v2221 = vlaneseq
    %v2222 = vshrl.u32 %v2221, 7
    %v2223 = vsub.s32 0, %v2222
    %v2224 = vrot.slane %v2219, %v2223
    %2226 = vmatprep.subr.mxu0 0.0
    %2227 = vmatpush1.msra.mxu0 %v2203
    %2228 = vmatprep.subr.mxu0 0.0
    %2229 = vmatpush1.msra.mxu0 %v2204
    %2230 = vmatprep.subr.mxu0 0.0
    %2231 = vmatpush1.msra.mxu0 %v2205
    %2232 = vmatprep.subr.mxu0 0.0
    %2233 = vmatpush1.msra.mxu0 %v2206
    %2234 = vmatprep.subr.mxu0 0.0
    %2235 = vmatpush1.msra.mxu0 %v2207
    %2236 = vmatprep.subr.mxu0 0.0
    %2237 = vmatpush1.msra.mxu0 %v2208
    %2238 = vmatprep.subr.mxu0 0.0
    %2239 = vmatpush1.msra.mxu0 %v2209
    %2240 = vmatprep.subr.mxu0 0.0
    %2241 = vmatpush1.msra.mxu0 %v2210
    %2242 = vmatprep.subr.mxu0 0.0
    %2243 = vmatpush1.msra.mxu0 %v2211
    %2244 = vmatprep.subr.mxu0 0.0
    %2245 = vmatpush1.msra.mxu0 %v2212
    %2246 = vmatprep.subr.mxu0 0.0
    %2247 = vmatpush1.msra.mxu0 %v2213
    %2248 = vmatprep.subr.mxu0 0.0
    %2249 = vmatpush1.msra.mxu0 %v2214
    %2250 = vmatprep.subr.mxu0 0.0
    %2251 = vmatpush1.msra.mxu0 %v2215
    %2252 = vmatprep.subr.mxu0 0.0
    %2253 = vmatpush1.msra.mxu0 %v2216
    %2254 = vmatprep.subr.mxu0 0.0
    %2255 = vmatpush1.msra.mxu0 %v2217
    %2256 = vmatprep.subr.mxu0 0.0
    %2257 = vmatpush1.msra.mxu0 %v2218
    %2258 = vmatprep.subr.mxu0 0.0
    %2259 = vmatpush1.msra.mxu0 0.0
    %2260 = vmatprep.subr.mxu0 0.0
    %2261 = vmatpush1.msra.mxu0 0.0
    %2262 = vmatprep.subr.mxu0 0.0
    %2263 = vmatpush1.msra.mxu0 0.0
    %2264 = vmatprep.subr.mxu0 0.0
    %2265 = vmatpush1.msra.mxu0 0.0
    %2266 = vmatprep.subr.mxu0 0.0
    %2267 = vmatpush1.msra.mxu0 0.0
    %2268 = vmatprep.subr.mxu0 0.0
    %2269 = vmatpush1.msra.mxu0 0.0
    %2270 = vmatprep.subr.mxu0 0.0
    %2271 = vmatpush1.msra.mxu0 0.0
    %2272 = vmatprep.subr.mxu0 0.0
    %2273 = vmatpush1.msra.mxu0 0.0
    %2274 = vmatprep.subr.mxu0 0.0
    %2275 = vmatpush1.msra.mxu0 0.0
    %2276 = vmatprep.subr.mxu0 0.0
    %2277 = vmatpush1.msra.mxu0 0.0
    %2278 = vmatprep.subr.mxu0 0.0
    %2279 = vmatpush1.msra.mxu0 0.0
    %2280 = vmatprep.subr.mxu0 0.0
    %2281 = vmatpush1.msra.mxu0 0.0
    %2282 = vmatprep.subr.mxu0 0.0
    %2283 = vmatpush1.msra.mxu0 0.0
    %2284 = vmatprep.subr.mxu0 0.0
    %2285 = vmatpush1.msra.mxu0 0.0
    %2286 = vmatprep.subr.mxu0 0.0
    %2287 = vmatpush1.msra.mxu0 0.0
    %2288 = vmatprep.subr.mxu0 0.0
    %2289 = vmatpush1.msra.mxu0 0.0
    %2290 = vmatprep.mubr.f32.mxu0 0.0
    %2291 = vmatmul.mubr.f32.gmra.mrb[0].mxu0 %v2202
    %v2292 = vpop.f32.mrb[0].mxu0
    %v2293 = vadd.f32 %v2224, %v2292
    %v2294 = vpop.f32.mrb[0].mxu0
    %2295 = vdwg.mxu0
    %vm2296 = vcmask 25600
    %2297 = vst.msk [vmem:[#allocation3] sm:$0x3] %vm2296, %v2293
    // Predicated region
    $region46: #{qnetwork_forward.1} parent=1 // pred_check
      _
    $region47: #{qnetwork_forward.1} parent=1 // pred_check_branch
      %2299 = sbr.rel (0) target = $region49
    $region48: #{qnetwork_forward.1} parent=1 // pred_region
      %s2301 = ssub.s32 32, 32
      %2302 = vsyncadd [#allocation4], %s2301
      %s2304 = sshll.u32 [#allocation3], 4
      %s2305 = int_to_ptr.vmem [resolvable:$true] %s2304
      %2307 = dma.vmem_to_hbm [thread:$0]  %s2305, 32, %s11, [#allocation4]
    $region49: #{qnetwork_forward.1} parent=1 // pred_fallthru
      _
    // Predicated region
    $region50: #{qnetwork_forward.1} parent=1 // pred_check
      _
    $region51: #{qnetwork_forward.1} parent=1 // pred_check_branch
      %2309 = sbr.rel (0) target = $region53
    $region52: #{qnetwork_forward.1} parent=1 // pred_region
      %2310 = dma.done [#allocation4], 32
    $region53: #{qnetwork_forward.1} parent=1 // pred_fallthru
      _
    %2311 = vsyncpa [#allocation4], 1

</llo_original>
